<compile_context>
chip_gen: v7x
topology: tpu7x:2x2x1
jax: 0.10.0
libtpu: 0.0.40
codegen_flags: <defaults>
</compile_context>

<pallas_src>
import functools

import jax
import jax.numpy as jnp
from jax.experimental import pallas as pl
from jax.experimental.pallas import tpu as pltpu


# ---------- utilities matching the PyTorch-side helpers ----------

def sub_filter_start_end(kernel_size, sub_kernel_size):
    center = kernel_size // 2
    dev = sub_kernel_size // 2
    start, end = center - dev, center + dev + 1
    return start, end


def get_same_padding(kernel_size):
    assert kernel_size % 2 > 0, "kernel size should be odd"
    return kernel_size // 2


def _default_compute_dtype():
    # bf16 multiplies (f32 accumulate) on chips with bf16 VALUs (v6e / v7x);
    # keep f32 on v5e and older (no bf16 VPU there).
    try:
        kind = jax.devices()[0].device_kind.lower()
    except Exception:
        return jnp.float32
    if "v6" in kind or "v7" in kind:
        return jnp.bfloat16
    return jnp.float32


# ---------- Pallas kernel ----------

def _dw_conv_kernel(x_ref, w_ref, o_ref, *, K, Ho, Wo, TH, stride, dilation,
                    compute_dtype):
    """Depthwise conv for one (batch, channel-block) tile.

    x_ref: (Hp, Wp, CB)  zero-padded input slab (VMEM)
    w_ref: (K, K, CB)    per-channel filters (VMEM; resident across batch steps)
    o_ref: (Ho, Wo, CB)  output tile (VMEM)
    """
    CB = o_ref.shape[-1]
    # Load + cast the (tiny) filter once; taps below are static indexes into it.
    w = w_ref[...].astype(compute_dtype)

    span_w = (Wo - 1) * stride + 1  # input width span covered per filter column

    def compute_chunk(h_out0, th):
        # `th` output rows starting at (possibly dynamic) output row h_out0.
        h_in0 = h_out0 * stride
        rows_in = (th - 1) * stride + (K - 1) * dilation + 1
        span_h = (th - 1) * stride + 1
        acc = jnp.zeros((th, Wo, CB), jnp.float32)     # stays in vregs
        for kw in range(K):                            # static unroll (width)
            # One W-shifted (sublane-offset) load per filter column; the kh
            # taps are leading-axis slices of this value (no extra relayout).
            xw = x_ref[pl.ds(h_in0, rows_in), pl.ds(kw * dilation, span_w), :]
            if stride > 1:
                xw = xw[:, ::stride, :]                # one W-subsample per kw
            xw = xw.astype(compute_dtype)              # cast once per slab
            part = None                                # per-kw partial sum
            for kh in range(K):                        # static unroll (height)
                h0 = kh * dilation
                patch = jax.lax.slice_in_dim(xw, h0, h0 + span_h, stride,
                                             axis=0)
                term = patch * w[kh, kw]
                part = term if part is None else part + term
            acc = acc + part.astype(jnp.float32)       # promote once per kw
        o_ref[pl.ds(h_out0, th), :, :] = acc.astype(o_ref.dtype)

    num_full = Ho // TH
    rem = Ho - num_full * TH
    if num_full > 0:
        def body(t, carry):
            compute_chunk(t * TH, TH)
            return carry
        jax.lax.fori_loop(0, num_full, body, 0, unroll=(num_full <= 8))
    if rem > 0:
        compute_chunk(num_full * TH, rem)


# ---------- module ----------

class DynamicSeparableConv2dPallas:
    KERNEL_TRANSFORM_MODE = None  # matches the reference default (no kernel transform)

    def __init__(self, max_in_channels, kernel_size_list, stride=1, dilation=1,
                 channels_per_group=1, bias=False, key=None, compute_dtype=None):
        # TODO(synk): channels_per_group > 1 (general grouped conv) not implemented;
        # only the pure depthwise case (channels_per_group == 1) is supported here.
        assert channels_per_group == 1
        assert not bias
        assert max_in_channels % channels_per_group == 0
        self.max_in_channels = max_in_channels
        self.channels_per_group = channels_per_group
        self.kernel_size_list = list(kernel_size_list)
        self.stride = stride
        self.dilation = dilation
        self.active_kernel_size = max(self.kernel_size_list)
        self.compute_dtype = jnp.dtype(
            compute_dtype if compute_dtype is not None else _default_compute_dtype())

        kmax = max(self.kernel_size_list)
        if key is None:
            key = jax.random.PRNGKey(0)
        # nn.Conv2d weight shape: (out, in/groups, k, k) = (C_max, cpg, kmax, kmax)
        fan_in = channels_per_group * kmax * kmax
        bound = 1.0 / (fan_in ** 0.5)
        self.weight = jax.random.uniform(
            key, (max_in_channels, channels_per_group, kmax, kmax),
            jnp.float32, -bound, bound)

    def get_active_filter(self, in_channel, kernel_size):
        kmax = max(self.kernel_size_list)
        start, end = sub_filter_start_end(kmax, kernel_size)
        # (in_channel, cpg, K, K) — center crop of the max-size filter.
        return self.weight[:in_channel, :, start:end, start:end]

    def __call__(self, x, kernel_size=None):
        # x: NCHW float32, in_channel <= max_in_channels
        if kernel_size is None:
            kernel_size = self.active_kernel_size
        N, C, H, W = x.shape
        assert C % self.channels_per_group == 0
        K = kernel_size
        s, d = self.stride, self.dilation
        filters = self.get_active_filter(C, K)               # (C, 1, K, K)
        pad = get_same_padding(K)                             # matches PyTorch module

        # Channel blocking: 128-lane blocks (zero-pad C when C > 128).
        # TODO(synk): for very small C, a W-on-lanes layout would raise lane
        # utilization; kept C-on-lanes for layout simplicity here.
        if C > 128:
            CB = 128
            C_pad = -(-C // 128) * 128
        else:
            CB, C_pad = C, C
        num_cb = C_pad // CB

        # NCHW -> NHWC, spatial zero pad + channel pad in a single pad op.
        # TODO(synk): drop these prologue/epilogue HBM passes by keeping the
        # model NHWC end-to-end and masking the zero border in-kernel.
        x_nhwc = jnp.transpose(x, (0, 2, 3, 1))
        x_p = jnp.pad(x_nhwc, ((0, 0), (pad, pad), (pad, pad), (0, C_pad - C)))
        Hp, Wp = H + 2 * pad, W + 2 * pad
        Ho = (Hp - d * (K - 1) - 1) // s + 1
        Wo = (Wp - d * (K - 1) - 1) // s + 1

        # filters -> (K, K, C_pad): per-channel weight broadcasts on the lane axis.
        w_kkc = jnp.transpose(filters[:, 0, :, :], (1, 2, 0))
        w_kkc = jnp.pad(w_kkc, ((0, 0), (0, 0), (0, C_pad - C)))

        # Output-row chunk so the f32 accumulator stays in vregs (~<=32 KiB).
        ACC_BYTES = 32 * 1024
        TH = max(1, min(Ho, ACC_BYTES // max(1, Wo * CB * 4)))

        kernel = functools.partial(
            _dw_conv_kernel, K=K, Ho=Ho, Wo=Wo, TH=TH,
            stride=s, dilation=d, compute_dtype=self.compute_dtype)

        # Explicit VMEM budget: double-buffered input/output blocks + weights.
        itemsize = x.dtype.itemsize
        footprint = (2 * Hp * Wp * CB * itemsize
                     + 2 * Ho * Wo * CB * itemsize
                     + 2 * K * K * CB * 4)
        vmem_limit = int(min(96 * 2**20, max(32 * 2**20, 2 * footprint + (4 << 20))))

        y_p = pl.pallas_call(
            kernel,
            out_shape=jax.ShapeDtypeStruct((N, Ho, Wo, C_pad), x.dtype),
            grid=(num_cb, N),
            in_specs=[
                # batch dim squeezed (None); channel block on the lane axis.
                pl.BlockSpec((None, Hp, Wp, CB), lambda cb, n: (n, 0, 0, cb)),
                # weight block index is constant across the inner batch axis ->
                # stays resident in VMEM (no per-step re-DMA).
                pl.BlockSpec((K, K, CB), lambda cb, n: (0, 0, cb)),
            ],
            out_specs=pl.BlockSpec((None, Ho, Wo, CB), lambda cb, n: (n, 0, 0, cb)),
            compiler_params=pltpu.CompilerParams(
                dimension_semantics=("parallel", "parallel"),
                vmem_limit_bytes=vmem_limit),
        )(x_p, w_kkc)

        y = y_p[..., :C] if C_pad != C else y_p
        # back to NCHW to mirror the PyTorch output layout
        return jnp.transpose(y, (0, 3, 1, 2))


# ---------- reference (plain JAX) for correctness check ----------

def _ref_depthwise_conv(x, filters, stride, pad, dilation):
    # x: NCHW, filters: (C, 1, K, K)
    C = x.shape[1]
    return jax.lax.conv_general_dilated(
        x, filters,
        window_strides=(stride, stride),
        padding=[(pad, pad), (pad, pad)],
        rhs_dilation=(dilation, dilation),
        dimension_numbers=("NCHW", "OIHW", "NCHW"),
        feature_group_count=C)


if __name__ == "__main__":
    key = jax.random.PRNGKey(0)
    kx1, kx2, kw1, kw2, kw3 = jax.random.split(key, 5)

    def check(mod, x, kernel_size):
        y = jax.block_until_ready(mod(x, kernel_size=kernel_size))
        eff_ks = max(mod.kernel_size_list) if kernel_size is None else kernel_size
        filt = mod.get_active_filter(x.shape[1], eff_ks)
        if mod.compute_dtype == jnp.dtype(jnp.float32):
            xr, fr, tol = x, filt, 1e-4
        else:
            # Compare against a reference on identically-quantized inputs; the
            # residual difference is only bf16 product/partial-sum rounding.
            xr = x.astype(mod.compute_dtype).astype(jnp.float32)
            fr = filt.astype(mod.compute_dtype).astype(jnp.float32)
            tol = 5e-2
        y_ref = _ref_depthwise_conv(xr, fr, mod.stride,
                                    get_same_padding(eff_ks), mod.dilation)
        if y.shape != y_ref.shape:
            return False
        return bool(jnp.allclose(y.astype(jnp.float32), y_ref, atol=tol, rtol=tol))

    ok = True

    # Small depthwise conv: active (max) kernel 5x5 and the cropped 3x3 sub-filter.
    mod_a = DynamicSeparableConv2dPallas(
        max_in_channels=8, kernel_size_list=[3, 5], stride=1, dilation=1, key=kw1)
    x_a = jax.random.normal(kx1, (2, 8, 16, 16), jnp.float32)  # NCHW
    ok = ok and check(mod_a, x_a, None)
    ok = ok and check(mod_a, x_a, 3)

    # Dilated variant.
    mod_b = DynamicSeparableConv2dPallas(
        max_in_channels=8, kernel_size_list=[3, 5], stride=1, dilation=2, key=kw2)
    ok = ok and check(mod_b, x_a, None)

    # Channel-blocked / channel-padded path (C=192 -> two 128-lane channel blocks).
    mod_c = DynamicSeparableConv2dPallas(
        max_in_channels=192, kernel_size_list=[3, 5], stride=1, dilation=1, key=kw3)
    x_c = jax.random.normal(kx2, (1, 192, 16, 16), jnp.float32)
    ok = ok and check(mod_c, x_c, 5)

    print("KERNEL_OK" if ok else "MISMATCH")
</pallas_src>

<mosaic_0001>
module attributes {stable_mosaic.version = 11 : i64} {
  func.func @_dw_conv_kernel(%arg0: i32, %arg1: i32, %arg2: memref<1x20x20x8xf32, #tpu.memory_space<vmem>>, %arg3: memref<5x5x8xf32, #tpu.memory_space<vmem>>, %arg4: memref<1x16x16x8xf32, #tpu.memory_space<vmem>>) attributes {dimension_semantics = [#tpu.dimension_semantics<parallel>, #tpu.dimension_semantics<parallel>], iteration_bounds = array<i64: 1, 2>, scalar_prefetch = 0 : i64, scratch_operands = 0 : i64, tpu.core_type = #tpu.core_type<tc>, window_params = [{transform_indices = @transform_0, window_bounds = array<i64: 1, 20, 20, 8>}, {transform_indices = @transform_1, window_bounds = array<i64: 5, 5, 8>}, {transform_indices = @transform_2, window_bounds = array<i64: 1, 16, 16, 8>}]} {
    %c0 = arith.constant 0 : index
    %c0_0 = arith.constant 0 : index
    %c0_1 = arith.constant 0 : index
    %0 = vector.load %arg3[%c0, %c0_0, %c0_1] : memref<5x5x8xf32, #tpu.memory_space<vmem>>, vector<5x5x8xf32>
    %c0_i32 = arith.constant 0 : i32
    %c16_i32 = arith.constant 16 : i32
    %1 = arith.muli %c0_i32, %c16_i32 : i32
    %c1_i32 = arith.constant 1 : i32
    %2 = arith.muli %1, %c1_i32 : i32
    %cst = arith.constant 0.000000e+00 : f32
    %3 = vector.broadcast %cst : f32 to vector<16x16x8xf32>
    %c0_2 = arith.constant 0 : index
    %4 = arith.index_cast %2 : i32 to index
    %c0_3 = arith.constant 0 : index
    %c0_4 = arith.constant 0 : index
    %5 = vector.load %arg2[%c0_2, %4, %c0_3, %c0_4] : memref<1x20x20x8xf32, #tpu.memory_space<vmem>>, vector<1x20x16x8xf32>
    %6 = vector.shape_cast %5 : vector<1x20x16x8xf32> to vector<20x16x8xf32>
    %7 = vector.extract_strided_slice %6 {offsets = [0, 0, 0], sizes = [16, 16, 8], strides = [1, 1, 1]} : vector<20x16x8xf32> to vector<16x16x8xf32>
    %8 = vector.extract_strided_slice %0 {offsets = [0, 0, 0], sizes = [1, 1, 8], strides = [1, 1, 1]} : vector<5x5x8xf32> to vector<1x1x8xf32>
    %9 = vector.shape_cast %8 : vector<1x1x8xf32> to vector<8xf32>
    %10 = vector.shape_cast %9 : vector<8xf32> to vector<1x1x8xf32>
    %11 = vector.broadcast %10 : vector<1x1x8xf32> to vector<16x16x8xf32>
    %12 = arith.mulf %7, %11 : vector<16x16x8xf32>
    %13 = vector.extract_strided_slice %6 {offsets = [1, 0, 0], sizes = [16, 16, 8], strides = [1, 1, 1]} : vector<20x16x8xf32> to vector<16x16x8xf32>
    %14 = vector.extract_strided_slice %0 {offsets = [1, 0, 0], sizes = [1, 1, 8], strides = [1, 1, 1]} : vector<5x5x8xf32> to vector<1x1x8xf32>
    %15 = vector.shape_cast %14 : vector<1x1x8xf32> to vector<8xf32>
    %16 = vector.shape_cast %15 : vector<8xf32> to vector<1x1x8xf32>
    %17 = vector.broadcast %16 : vector<1x1x8xf32> to vector<16x16x8xf32>
    %18 = arith.mulf %13, %17 : vector<16x16x8xf32>
    %19 = arith.addf %12, %18 : vector<16x16x8xf32>
    %20 = vector.extract_strided_slice %6 {offsets = [2, 0, 0], sizes = [16, 16, 8], strides = [1, 1, 1]} : vector<20x16x8xf32> to vector<16x16x8xf32>
    %21 = vector.extract_strided_slice %0 {offsets = [2, 0, 0], sizes = [1, 1, 8], strides = [1, 1, 1]} : vector<5x5x8xf32> to vector<1x1x8xf32>
    %22 = vector.shape_cast %21 : vector<1x1x8xf32> to vector<8xf32>
    %23 = vector.shape_cast %22 : vector<8xf32> to vector<1x1x8xf32>
    %24 = vector.broadcast %23 : vector<1x1x8xf32> to vector<16x16x8xf32>
    %25 = arith.mulf %20, %24 : vector<16x16x8xf32>
    %26 = arith.addf %19, %25 : vector<16x16x8xf32>
    %27 = vector.extract_strided_slice %6 {offsets = [3, 0, 0], sizes = [16, 16, 8], strides = [1, 1, 1]} : vector<20x16x8xf32> to vector<16x16x8xf32>
    %28 = vector.extract_strided_slice %0 {offsets = [3, 0, 0], sizes = [1, 1, 8], strides = [1, 1, 1]} : vector<5x5x8xf32> to vector<1x1x8xf32>
    %29 = vector.shape_cast %28 : vector<1x1x8xf32> to vector<8xf32>
    %30 = vector.shape_cast %29 : vector<8xf32> to vector<1x1x8xf32>
    %31 = vector.broadcast %30 : vector<1x1x8xf32> to vector<16x16x8xf32>
    %32 = arith.mulf %27, %31 : vector<16x16x8xf32>
    %33 = arith.addf %26, %32 : vector<16x16x8xf32>
    %34 = vector.extract_strided_slice %6 {offsets = [4, 0, 0], sizes = [16, 16, 8], strides = [1, 1, 1]} : vector<20x16x8xf32> to vector<16x16x8xf32>
    %35 = vector.extract_strided_slice %0 {offsets = [4, 0, 0], sizes = [1, 1, 8], strides = [1, 1, 1]} : vector<5x5x8xf32> to vector<1x1x8xf32>
    %36 = vector.shape_cast %35 : vector<1x1x8xf32> to vector<8xf32>
    %37 = vector.shape_cast %36 : vector<8xf32> to vector<1x1x8xf32>
    %38 = vector.broadcast %37 : vector<1x1x8xf32> to vector<16x16x8xf32>
    %39 = arith.mulf %34, %38 : vector<16x16x8xf32>
    %40 = arith.addf %33, %39 : vector<16x16x8xf32>
    %41 = arith.addf %3, %40 : vector<16x16x8xf32>
    %c0_5 = arith.constant 0 : index
    %42 = arith.index_cast %2 : i32 to index
    %c1 = arith.constant 1 : index
    %c0_6 = arith.constant 0 : index
    %43 = vector.load %arg2[%c0_5, %42, %c1, %c0_6] : memref<1x20x20x8xf32, #tpu.memory_space<vmem>>, vector<1x20x16x8xf32>
    %44 = vector.shape_cast %43 : vector<1x20x16x8xf32> to vector<20x16x8xf32>
    %45 = vector.extract_strided_slice %44 {offsets = [0, 0, 0], sizes = [16, 16, 8], strides = [1, 1, 1]} : vector<20x16x8xf32> to vector<16x16x8xf32>
    %46 = vector.extract_strided_slice %0 {offsets = [0, 1, 0], sizes = [1, 1, 8], strides = [1, 1, 1]} : vector<5x5x8xf32> to vector<1x1x8xf32>
    %47 = vector.shape_cast %46 : vector<1x1x8xf32> to vector<8xf32>
    %48 = vector.shape_cast %47 : vector<8xf32> to vector<1x1x8xf32>
    %49 = vector.broadcast %48 : vector<1x1x8xf32> to vector<16x16x8xf32>
    %50 = arith.mulf %45, %49 : vector<16x16x8xf32>
    %51 = vector.extract_strided_slice %44 {offsets = [1, 0, 0], sizes = [16, 16, 8], strides = [1, 1, 1]} : vector<20x16x8xf32> to vector<16x16x8xf32>
    %52 = vector.extract_strided_slice %0 {offsets = [1, 1, 0], sizes = [1, 1, 8], strides = [1, 1, 1]} : vector<5x5x8xf32> to vector<1x1x8xf32>
    %53 = vector.shape_cast %52 : vector<1x1x8xf32> to vector<8xf32>
    %54 = vector.shape_cast %53 : vector<8xf32> to vector<1x1x8xf32>
    %55 = vector.broadcast %54 : vector<1x1x8xf32> to vector<16x16x8xf32>
    %56 = arith.mulf %51, %55 : vector<16x16x8xf32>
    %57 = arith.addf %50, %56 : vector<16x16x8xf32>
    %58 = vector.extract_strided_slice %44 {offsets = [2, 0, 0], sizes = [16, 16, 8], strides = [1, 1, 1]} : vector<20x16x8xf32> to vector<16x16x8xf32>
    %59 = vector.extract_strided_slice %0 {offsets = [2, 1, 0], sizes = [1, 1, 8], strides = [1, 1, 1]} : vector<5x5x8xf32> to vector<1x1x8xf32>
    %60 = vector.shape_cast %59 : vector<1x1x8xf32> to vector<8xf32>
    %61 = vector.shape_cast %60 : vector<8xf32> to vector<1x1x8xf32>
    %62 = vector.broadcast %61 : vector<1x1x8xf32> to vector<16x16x8xf32>
    %63 = arith.mulf %58, %62 : vector<16x16x8xf32>
    %64 = arith.addf %57, %63 : vector<16x16x8xf32>
    %65 = vector.extract_strided_slice %44 {offsets = [3, 0, 0], sizes = [16, 16, 8], strides = [1, 1, 1]} : vector<20x16x8xf32> to vector<16x16x8xf32>
    %66 = vector.extract_strided_slice %0 {offsets = [3, 1, 0], sizes = [1, 1, 8], strides = [1, 1, 1]} : vector<5x5x8xf32> to vector<1x1x8xf32>
    %67 = vector.shape_cast %66 : vector<1x1x8xf32> to vector<8xf32>
    %68 = vector.shape_cast %67 : vector<8xf32> to vector<1x1x8xf32>
    %69 = vector.broadcast %68 : vector<1x1x8xf32> to vector<16x16x8xf32>
    %70 = arith.mulf %65, %69 : vector<16x16x8xf32>
    %71 = arith.addf %64, %70 : vector<16x16x8xf32>
    %72 = vector.extract_strided_slice %44 {offsets = [4, 0, 0], sizes = [16, 16, 8], strides = [1, 1, 1]} : vector<20x16x8xf32> to vector<16x16x8xf32>
    %73 = vector.extract_strided_slice %0 {offsets = [4, 1, 0], sizes = [1, 1, 8], strides = [1, 1, 1]} : vector<5x5x8xf32> to vector<1x1x8xf32>
    %74 = vector.shape_cast %73 : vector<1x1x8xf32> to vector<8xf32>
    %75 = vector.shape_cast %74 : vector<8xf32> to vector<1x1x8xf32>
    %76 = vector.broadcast %75 : vector<1x1x8xf32> to vector<16x16x8xf32>
    %77 = arith.mulf %72, %76 : vector<16x16x8xf32>
    %78 = arith.addf %71, %77 : vector<16x16x8xf32>
    %79 = arith.addf %41, %78 : vector<16x16x8xf32>
    %c0_7 = arith.constant 0 : index
    %80 = arith.index_cast %2 : i32 to index
    %c2 = arith.constant 2 : index
    %c0_8 = arith.constant 0 : index
    %81 = vector.load %arg2[%c0_7, %80, %c2, %c0_8] : memref<1x20x20x8xf32, #tpu.memory_space<vmem>>, vector<1x20x16x8xf32>
    %82 = vector.shape_cast %81 : vector<1x20x16x8xf32> to vector<20x16x8xf32>
    %83 = vector.extract_strided_slice %82 {offsets = [0, 0, 0], sizes = [16, 16, 8], strides = [1, 1, 1]} : vector<20x16x8xf32> to vector<16x16x8xf32>
    %84 = vector.extract_strided_slice %0 {offsets = [0, 2, 0], sizes = [1, 1, 8], strides = [1, 1, 1]} : vector<5x5x8xf32> to vector<1x1x8xf32>
    %85 = vector.shape_cast %84 : vector<1x1x8xf32> to vector<8xf32>
    %86 = vector.shape_cast %85 : vector<8xf32> to vector<1x1x8xf32>
    %87 = vector.broadcast %86 : vector<1x1x8xf32> to vector<16x16x8xf32>
    %88 = arith.mulf %83, %87 : vector<16x16x8xf32>
    %89 = vector.extract_strided_slice %82 {offsets = [1, 0, 0], sizes = [16, 16, 8], strides = [1, 1, 1]} : vector<20x16x8xf32> to vector<16x16x8xf32>
    %90 = vector.extract_strided_slice %0 {offsets = [1, 2, 0], sizes = [1, 1, 8], strides = [1, 1, 1]} : vector<5x5x8xf32> to vector<1x1x8xf32>
    %91 = vector.shape_cast %90 : vector<1x1x8xf32> to vector<8xf32>
    %92 = vector.shape_cast %91 : vector<8xf32> to vector<1x1x8xf32>
    %93 = vector.broadcast %92 : vector<1x1x8xf32> to vector<16x16x8xf32>
    %94 = arith.mulf %89, %93 : vector<16x16x8xf32>
    %95 = arith.addf %88, %94 : vector<16x16x8xf32>
    %96 = vector.extract_strided_slice %82 {offsets = [2, 0, 0], sizes = [16, 16, 8], strides = [1, 1, 1]} : vector<20x16x8xf32> to vector<16x16x8xf32>
    %97 = vector.extract_strided_slice %0 {offsets = [2, 2, 0], sizes = [1, 1, 8], strides = [1, 1, 1]} : vector<5x5x8xf32> to vector<1x1x8xf32>
    %98 = vector.shape_cast %97 : vector<1x1x8xf32> to vector<8xf32>
    %99 = vector.shape_cast %98 : vector<8xf32> to vector<1x1x8xf32>
    %100 = vector.broadcast %99 : vector<1x1x8xf32> to vector<16x16x8xf32>
    %101 = arith.mulf %96, %100 : vector<16x16x8xf32>
    %102 = arith.addf %95, %101 : vector<16x16x8xf32>
    %103 = vector.extract_strided_slice %82 {offsets = [3, 0, 0], sizes = [16, 16, 8], strides = [1, 1, 1]} : vector<20x16x8xf32> to vector<16x16x8xf32>
    %104 = vector.extract_strided_slice %0 {offsets = [3, 2, 0], sizes = [1, 1, 8], strides = [1, 1, 1]} : vector<5x5x8xf32> to vector<1x1x8xf32>
    %105 = vector.shape_cast %104 : vector<1x1x8xf32> to vector<8xf32>
    %106 = vector.shape_cast %105 : vector<8xf32> to vector<1x1x8xf32>
    %107 = vector.broadcast %106 : vector<1x1x8xf32> to vector<16x16x8xf32>
    %108 = arith.mulf %103, %107 : vector<16x16x8xf32>
    %109 = arith.addf %102, %108 : vector<16x16x8xf32>
    %110 = vector.extract_strided_slice %82 {offsets = [4, 0, 0], sizes = [16, 16, 8], strides = [1, 1, 1]} : vector<20x16x8xf32> to vector<16x16x8xf32>
    %111 = vector.extract_strided_slice %0 {offsets = [4, 2, 0], sizes = [1, 1, 8], strides = [1, 1, 1]} : vector<5x5x8xf32> to vector<1x1x8xf32>
    %112 = vector.shape_cast %111 : vector<1x1x8xf32> to vector<8xf32>
    %113 = vector.shape_cast %112 : vector<8xf32> to vector<1x1x8xf32>
    %114 = vector.broadcast %113 : vector<1x1x8xf32> to vector<16x16x8xf32>
    %115 = arith.mulf %110, %114 : vector<16x16x8xf32>
    %116 = arith.addf %109, %115 : vector<16x16x8xf32>
    %117 = arith.addf %79, %116 : vector<16x16x8xf32>
    %c0_9 = arith.constant 0 : index
    %118 = arith.index_cast %2 : i32 to index
    %c3 = arith.constant 3 : index
    %c0_10 = arith.constant 0 : index
    %119 = vector.load %arg2[%c0_9, %118, %c3, %c0_10] : memref<1x20x20x8xf32, #tpu.memory_space<vmem>>, vector<1x20x16x8xf32>
    %120 = vector.shape_cast %119 : vector<1x20x16x8xf32> to vector<20x16x8xf32>
    %121 = vector.extract_strided_slice %120 {offsets = [0, 0, 0], sizes = [16, 16, 8], strides = [1, 1, 1]} : vector<20x16x8xf32> to vector<16x16x8xf32>
    %122 = vector.extract_strided_slice %0 {offsets = [0, 3, 0], sizes = [1, 1, 8], strides = [1, 1, 1]} : vector<5x5x8xf32> to vector<1x1x8xf32>
    %123 = vector.shape_cast %122 : vector<1x1x8xf32> to vector<8xf32>
    %124 = vector.shape_cast %123 : vector<8xf32> to vector<1x1x8xf32>
    %125 = vector.broadcast %124 : vector<1x1x8xf32> to vector<16x16x8xf32>
    %126 = arith.mulf %121, %125 : vector<16x16x8xf32>
    %127 = vector.extract_strided_slice %120 {offsets = [1, 0, 0], sizes = [16, 16, 8], strides = [1, 1, 1]} : vector<20x16x8xf32> to vector<16x16x8xf32>
    %128 = vector.extract_strided_slice %0 {offsets = [1, 3, 0], sizes = [1, 1, 8], strides = [1, 1, 1]} : vector<5x5x8xf32> to vector<1x1x8xf32>
    %129 = vector.shape_cast %128 : vector<1x1x8xf32> to vector<8xf32>
    %130 = vector.shape_cast %129 : vector<8xf32> to vector<1x1x8xf32>
    %131 = vector.broadcast %130 : vector<1x1x8xf32> to vector<16x16x8xf32>
    %132 = arith.mulf %127, %131 : vector<16x16x8xf32>
    %133 = arith.addf %126, %132 : vector<16x16x8xf32>
    %134 = vector.extract_strided_slice %120 {offsets = [2, 0, 0], sizes = [16, 16, 8], strides = [1, 1, 1]} : vector<20x16x8xf32> to vector<16x16x8xf32>
    %135 = vector.extract_strided_slice %0 {offsets = [2, 3, 0], sizes = [1, 1, 8], strides = [1, 1, 1]} : vector<5x5x8xf32> to vector<1x1x8xf32>
    %136 = vector.shape_cast %135 : vector<1x1x8xf32> to vector<8xf32>
    %137 = vector.shape_cast %136 : vector<8xf32> to vector<1x1x8xf32>
    %138 = vector.broadcast %137 : vector<1x1x8xf32> to vector<16x16x8xf32>
    %139 = arith.mulf %134, %138 : vector<16x16x8xf32>
    %140 = arith.addf %133, %139 : vector<16x16x8xf32>
    %141 = vector.extract_strided_slice %120 {offsets = [3, 0, 0], sizes = [16, 16, 8], strides = [1, 1, 1]} : vector<20x16x8xf32> to vector<16x16x8xf32>
    %142 = vector.extract_strided_slice %0 {offsets = [3, 3, 0], sizes = [1, 1, 8], strides = [1, 1, 1]} : vector<5x5x8xf32> to vector<1x1x8xf32>
    %143 = vector.shape_cast %142 : vector<1x1x8xf32> to vector<8xf32>
    %144 = vector.shape_cast %143 : vector<8xf32> to vector<1x1x8xf32>
    %145 = vector.broadcast %144 : vector<1x1x8xf32> to vector<16x16x8xf32>
    %146 = arith.mulf %141, %145 : vector<16x16x8xf32>
    %147 = arith.addf %140, %146 : vector<16x16x8xf32>
    %148 = vector.extract_strided_slice %120 {offsets = [4, 0, 0], sizes = [16, 16, 8], strides = [1, 1, 1]} : vector<20x16x8xf32> to vector<16x16x8xf32>
    %149 = vector.extract_strided_slice %0 {offsets = [4, 3, 0], sizes = [1, 1, 8], strides = [1, 1, 1]} : vector<5x5x8xf32> to vector<1x1x8xf32>
    %150 = vector.shape_cast %149 : vector<1x1x8xf32> to vector<8xf32>
    %151 = vector.shape_cast %150 : vector<8xf32> to vector<1x1x8xf32>
    %152 = vector.broadcast %151 : vector<1x1x8xf32> to vector<16x16x8xf32>
    %153 = arith.mulf %148, %152 : vector<16x16x8xf32>
    %154 = arith.addf %147, %153 : vector<16x16x8xf32>
    %155 = arith.addf %117, %154 : vector<16x16x8xf32>
    %c0_11 = arith.constant 0 : index
    %156 = arith.index_cast %2 : i32 to index
    %c4 = arith.constant 4 : index
    %c0_12 = arith.constant 0 : index
    %157 = vector.load %arg2[%c0_11, %156, %c4, %c0_12] : memref<1x20x20x8xf32, #tpu.memory_space<vmem>>, vector<1x20x16x8xf32>
    %158 = vector.shape_cast %157 : vector<1x20x16x8xf32> to vector<20x16x8xf32>
    %159 = vector.extract_strided_slice %158 {offsets = [0, 0, 0], sizes = [16, 16, 8], strides = [1, 1, 1]} : vector<20x16x8xf32> to vector<16x16x8xf32>
    %160 = vector.extract_strided_slice %0 {offsets = [0, 4, 0], sizes = [1, 1, 8], strides = [1, 1, 1]} : vector<5x5x8xf32> to vector<1x1x8xf32>
    %161 = vector.shape_cast %160 : vector<1x1x8xf32> to vector<8xf32>
    %162 = vector.shape_cast %161 : vector<8xf32> to vector<1x1x8xf32>
    %163 = vector.broadcast %162 : vector<1x1x8xf32> to vector<16x16x8xf32>
    %164 = arith.mulf %159, %163 : vector<16x16x8xf32>
    %165 = vector.extract_strided_slice %158 {offsets = [1, 0, 0], sizes = [16, 16, 8], strides = [1, 1, 1]} : vector<20x16x8xf32> to vector<16x16x8xf32>
    %166 = vector.extract_strided_slice %0 {offsets = [1, 4, 0], sizes = [1, 1, 8], strides = [1, 1, 1]} : vector<5x5x8xf32> to vector<1x1x8xf32>
    %167 = vector.shape_cast %166 : vector<1x1x8xf32> to vector<8xf32>
    %168 = vector.shape_cast %167 : vector<8xf32> to vector<1x1x8xf32>
    %169 = vector.broadcast %168 : vector<1x1x8xf32> to vector<16x16x8xf32>
    %170 = arith.mulf %165, %169 : vector<16x16x8xf32>
    %171 = arith.addf %164, %170 : vector<16x16x8xf32>
    %172 = vector.extract_strided_slice %158 {offsets = [2, 0, 0], sizes = [16, 16, 8], strides = [1, 1, 1]} : vector<20x16x8xf32> to vector<16x16x8xf32>
    %173 = vector.extract_strided_slice %0 {offsets = [2, 4, 0], sizes = [1, 1, 8], strides = [1, 1, 1]} : vector<5x5x8xf32> to vector<1x1x8xf32>
    %174 = vector.shape_cast %173 : vector<1x1x8xf32> to vector<8xf32>
    %175 = vector.shape_cast %174 : vector<8xf32> to vector<1x1x8xf32>
    %176 = vector.broadcast %175 : vector<1x1x8xf32> to vector<16x16x8xf32>
    %177 = arith.mulf %172, %176 : vector<16x16x8xf32>
    %178 = arith.addf %171, %177 : vector<16x16x8xf32>
    %179 = vector.extract_strided_slice %158 {offsets = [3, 0, 0], sizes = [16, 16, 8], strides = [1, 1, 1]} : vector<20x16x8xf32> to vector<16x16x8xf32>
    %180 = vector.extract_strided_slice %0 {offsets = [3, 4, 0], sizes = [1, 1, 8], strides = [1, 1, 1]} : vector<5x5x8xf32> to vector<1x1x8xf32>
    %181 = vector.shape_cast %180 : vector<1x1x8xf32> to vector<8xf32>
    %182 = vector.shape_cast %181 : vector<8xf32> to vector<1x1x8xf32>
    %183 = vector.broadcast %182 : vector<1x1x8xf32> to vector<16x16x8xf32>
    %184 = arith.mulf %179, %183 : vector<16x16x8xf32>
    %185 = arith.addf %178, %184 : vector<16x16x8xf32>
    %186 = vector.extract_strided_slice %158 {offsets = [4, 0, 0], sizes = [16, 16, 8], strides = [1, 1, 1]} : vector<20x16x8xf32> to vector<16x16x8xf32>
    %187 = vector.extract_strided_slice %0 {offsets = [4, 4, 0], sizes = [1, 1, 8], strides = [1, 1, 1]} : vector<5x5x8xf32> to vector<1x1x8xf32>
    %188 = vector.shape_cast %187 : vector<1x1x8xf32> to vector<8xf32>
    %189 = vector.shape_cast %188 : vector<8xf32> to vector<1x1x8xf32>
    %190 = vector.broadcast %189 : vector<1x1x8xf32> to vector<16x16x8xf32>
    %191 = arith.mulf %186, %190 : vector<16x16x8xf32>
    %192 = arith.addf %185, %191 : vector<16x16x8xf32>
    %193 = arith.addf %155, %192 : vector<16x16x8xf32>
    %c0_13 = arith.constant 0 : index
    %194 = arith.index_cast %1 : i32 to index
    %c0_14 = arith.constant 0 : index
    %c0_15 = arith.constant 0 : index
    %195 = vector.load %arg4[%c0_13, %194, %c0_14, %c0_15] : memref<1x16x16x8xf32, #tpu.memory_space<vmem>>, vector<1x16x16x8xf32>
    %196 = vector.shape_cast %195 : vector<1x16x16x8xf32> to vector<16x16x8xf32>
    %197 = vector.shape_cast %193 : vector<16x16x8xf32> to vector<1x16x16x8xf32>
    tpu.vector_store %arg4[%c0_13, %194, %c0_14, %c0_15], %197 {strides = array<i32>} : memref<1x16x16x8xf32, #tpu.memory_space<vmem>>, vector<1x16x16x8xf32>,
    %c1_i32_16 = arith.constant 1 : i32
    return
  }
  func.func @transform_0(%arg0: i32, %arg1: i32) -> (i32, i32, i32, i32) {
    %c0_i32 = arith.constant 0 : i32
    %c0_i32_0 = arith.constant 0 : i32
    %c0_i32_1 = arith.constant 0 : i32
    return %arg1, %c0_i32, %c0_i32_0, %arg0 : i32, i32, i32, i32
  }
  func.func @transform_1(%arg0: i32, %arg1: i32) -> (i32, i32, i32) {
    %c0_i32 = arith.constant 0 : i32
    %c0_i32_0 = arith.constant 0 : i32
    %c0_i32_1 = arith.constant 0 : i32
    return %c0_i32, %c0_i32_0, %arg0 : i32, i32, i32
  }
  func.func @transform_2(%arg0: i32, %arg1: i32) -> (i32, i32, i32, i32) {
    %c0_i32 = arith.constant 0 : i32
    %c0_i32_0 = arith.constant 0 : i32
    %c0_i32_1 = arith.constant 0 : i32
    return %arg1, %c0_i32, %c0_i32_0, %arg0 : i32, i32, i32, i32
  }
}

</mosaic_0001>

<llo_original>
// kernel: tpu_custom_call.1
$region0: #{tpu_custom_call.1}
  #allocation0 [shape = 'u32[]', space=smem, size = 0x4, offset = 0x4, fixed_abs, tag = 'smem constant byte address 0x4 - core index']
  #allocation1 [shape = 'u32[144,128]{1,0:T(1,128)}', space=vmem, size = 0x12000, scoped, tag = 'internal scratch']
  %s0 = inlined_call_operand.vmem [shape: f32[2,20,20,8], index: 0, kind: input, shape index: {}]
  %s1 = inlined_call_operand.vmem [shape: f32[5,5,8], index: 1, kind: input, shape index: {}]
  %s2 = inlined_call_operand.vmem [shape: f32[2,16,16,8], index: 2, kind: output, shape index: {}]
  %s3 = sld [smem:[#allocation0]]
  $region41: #{tpu_custom_call.1} parent=0
    _
  %s5 = ssub.s32 1, %s3
  %s6 = scalar_select 0, %s5, %s3
  loop: start=0, step=1, limit=4
  $region2: #{tpu_custom_call.1} parent=0 // loop_pre_header
    _
  $region3: #{tpu_custom_call.1} parent=0 // loop_header
    %s8 = sphi 0, %s12
    %p9 = scmp.ge.s32.totalorder %s8, 4
    %s15 = sphi 0, %s27
    %s16 = sphi 0, %s23
    %s17 = sphi 0, %s15
    %s18 = sphi 0, %s16
    %s19 = sphi 0, %s17
    %s20 = sphi 0, %s18
    %s32 = sphi 0, %s34
    %s35 = sphi 0, %s32
    %s36 = sphi 0, %s35
    %s52 = sphi 0, %s36
    %s58 = sphi 0, %s60
    %s61 = sphi 0, %s58
    %s62 = sphi 0, %s61
    %s78 = sphi 0, %s62
    %s86 = sphi 0, %s88
    %s89 = sphi 0, %s86
    %s90 = sphi 0, %s89
    %s106 = sphi 0, %s90
  $region4: #{tpu_custom_call.1} parent=0 // loop_header_branch
    %11 = sbr.rel (%p9) target = $region8
  $region5: #{tpu_custom_call.1} parent=0 // loop_body
    %s13 = ssub.s32 %s8, 1
    %s14 = ssub.s32 %s8, 2
    %s21 = sadd.s32 1, %s16
    %p22 = scmp.ge.s32.totalorder %s21, 2
    %s23 = scalar_select %p22, 0, %s21
    %s24 = sadd.s32 1, %s15
    %s25 = scalar_select %p22, %s24, %s15
    %p26 = scmp.ge.s32.totalorder %s25, 1
    %s27 = scalar_select %p26, 0, %s25
    %s28 = ssub.s32 %s16, %s23
    %s29 = ssub.s32 %s15, %s27
    %s30 = sor.u32 %s28, %s29
    %p31 = scmp.eq.s32.totalorder %s30, 0
    %s33 = sadd.s32 %s32, 1
    %s34 = scalar_select %p31, %s32, %s33
    %p37 = pneg %p31
    %p38 = scmp.eq.s32.totalorder %s8, 1
    %p39 = por %p37, %p38
    %p40 = scmp.ne.s32.totalorder %s32, %s35
    %p41 = scmp.eq.s32.totalorder %s8, 0
    %p42 = por %p40, %p41
    %p43 = scmp.ne.s32.totalorder %s32, %s35
    %p44 = scmp.eq.s32.totalorder %s13, 1
    %p45 = por %p43, %p44
    %p46 = scmp.ne.s32.totalorder %s35, %s36
    %p47 = scmp.eq.s32.totalorder %s13, 0
    %p48 = por %p46, %p47
    %p49 = scmp.ne.s32.totalorder %s35, %s36
    %p50 = scmp.eq.s32.totalorder %s14, 1
    %p51 = por %p49, %p50
    %p53 = scmp.ne.s32.totalorder %s36, %s52
    %p54 = scmp.eq.s32.totalorder %s14, 0
    %p55 = por %p53, %p54
    %s56 = ssub.s32 %s15, %s27
    %p57 = scmp.eq.s32.totalorder %s56, 0
    %s59 = sadd.s32 %s58, 1
    %s60 = scalar_select %p57, %s58, %s59
    %p63 = pneg %p57
    %p64 = scmp.eq.s32.totalorder %s8, 1
    %p65 = por %p63, %p64
    %p66 = scmp.ne.s32.totalorder %s58, %s61
    %p67 = scmp.eq.s32.totalorder %s8, 0
    %p68 = por %p66, %p67
    %p69 = scmp.ne.s32.totalorder %s58, %s61
    %p70 = scmp.eq.s32.totalorder %s13, 1
    %p71 = por %p69, %p70
    %p72 = scmp.ne.s32.totalorder %s61, %s62
    %p73 = scmp.eq.s32.totalorder %s13, 0
    %p74 = por %p72, %p73
    %p75 = scmp.ne.s32.totalorder %s61, %s62
    %p76 = scmp.eq.s32.totalorder %s14, 1
    %p77 = por %p75, %p76
    %p79 = scmp.ne.s32.totalorder %s62, %s78
    %p80 = scmp.eq.s32.totalorder %s14, 0
    %p81 = por %p79, %p80
    %s82 = ssub.s32 %s16, %s23
    %s83 = ssub.s32 %s15, %s27
    %s84 = sor.u32 %s82, %s83
    %p85 = scmp.eq.s32.totalorder %s84, 0
    %s87 = sadd.s32 %s86, 1
    %s88 = scalar_select %p85, %s86, %s87
    %p91 = pneg %p85
    %p92 = scmp.eq.s32.totalorder %s8, 1
    %p93 = por %p91, %p92
    %p94 = scmp.ne.s32.totalorder %s86, %s89
    %p95 = scmp.eq.s32.totalorder %s8, 0
    %p96 = por %p94, %p95
    %p97 = scmp.ne.s32.totalorder %s86, %s89
    %p98 = scmp.eq.s32.totalorder %s13, 1
    %p99 = por %p97, %p98
    %p100 = scmp.ne.s32.totalorder %s89, %s90
    %p101 = scmp.eq.s32.totalorder %s13, 0
    %p102 = por %p100, %p101
    %p103 = scmp.ne.s32.totalorder %s89, %s90
    %p104 = scmp.eq.s32.totalorder %s14, 1
    %p105 = por %p103, %p104
    %p107 = scmp.ne.s32.totalorder %s90, %s106
    %p108 = scmp.eq.s32.totalorder %s14, 0
    %p109 = por %p107, %p108
    %p110 = scmp.le.s32.totalorder 1, %s8
    %p111 = scmp.lt.s32.totalorder %s8, 3
    %p112 = pnand %p110, %p111
    %p113 = pneg %p112
    // Predicated region
    $region9: #{tpu_custom_call.1} parent=5 // pred_check
      _
    $region10: #{tpu_custom_call.1} parent=5 // pred_check_branch
      %115 = sbr.rel (%p112) target = $region12
    $region11: #{tpu_custom_call.1} parent=5 // pred_region
      %s116 = ssub.s32 %s8, 1
      // Predicated region
      $region13: #{tpu_custom_call.1} parent=11 // pred_check
        %p117 = pneg %p74
      $region14: #{tpu_custom_call.1} parent=11 // pred_check_branch
        %119 = sbr.rel (%p117) target = $region16
      $region15: #{tpu_custom_call.1} parent=11 // pred_region
        %p120 = scmp.lt.s32.totalorder %s17, 0
        %s121 = scalar_select %p120, %s17, 0
        %s122 = smul.addr %s121, 8
        %s123 = scalar_lea.vmem %s1, %s122
      $region16: #{tpu_custom_call.1} parent=11 // pred_fallthru
        _
    $region12: #{tpu_custom_call.1} parent=5 // pred_fallthru
      _
    %p124 = scmp.lt.s32.totalorder %s8, 2
    // Predicated region
    $region17: #{tpu_custom_call.1} parent=5 // pred_check
      %p125 = pneg %p124
    $region18: #{tpu_custom_call.1} parent=5 // pred_check_branch
      %127 = sbr.rel (%p125) target = $region20
    $region19: #{tpu_custom_call.1} parent=5 // pred_region
      // Predicated region
      $region21: #{tpu_custom_call.1} parent=19 // pred_check
        %p128 = pneg %p42
      $region22: #{tpu_custom_call.1} parent=19 // pred_check_branch
        %130 = sbr.rel (%p128) target = $region24
      $region23: #{tpu_custom_call.1} parent=19 // pred_region
        %p131 = scmp.lt.s32.totalorder %s16, 1
        %s132 = scalar_select %p131, %s16, 1
        %p133 = scmp.lt.s32.totalorder %s15, 0
        %s134 = scalar_select %p133, %s15, 0
        %s135 = smul.addr %s132, 60
        %s136 = sadd.s32 %s134, %s135
        %s137 = smul.addr %s136, 8
        %s138 = scalar_lea.vmem %s0, %s137
      $region24: #{tpu_custom_call.1} parent=19 // pred_fallthru
        _
    $region20: #{tpu_custom_call.1} parent=5 // pred_fallthru
      _
    %p139 = scmp.le.s32.totalorder 1, %s8
    %p140 = scmp.lt.s32.totalorder %s8, 3
    %p141 = pnand %p139, %p140
    %p142 = pneg %p141
    // Predicated region
    $region25: #{tpu_custom_call.1} parent=5 // pred_check
      _
    $region26: #{tpu_custom_call.1} parent=5 // pred_check_branch
      %144 = sbr.rel (%p141) target = $region28
    $region27: #{tpu_custom_call.1} parent=5 // pred_region
      %s145 = ssub.s32 %s8, 1
      %p146 = scmp.lt.s32.totalorder %s18, 1
      %s147 = scalar_select %p146, %s18, 1
      %p148 = scmp.lt.s32.totalorder %s17, 0
      %s149 = scalar_select %p148, %s17, 0
      %s150 = smul.addr %s147, 60
      %s151 = sadd.s32 %s149, %s150
      %s152 = smul.addr %s151, 8
      %s153 = scalar_lea.vmem %s0, %s152
      %p154 = pneg %p48
      %p155 = pneg %p45
      %p156 = scmp.lt.s32.totalorder %s17, 0
      %s157 = scalar_select %p156, %s17, 0
      %s158 = smul.addr %s157, 8
      %s159 = scalar_lea.vmem %s1, %s158
      %p160 = pneg %p74
      %p161 = pneg %p71
      %p162 = pneg %p102
      %p163 = pneg %p99
      %p164 = scmp.lt.s32.totalorder %s18, 1
      %s165 = scalar_select %p164, %s18, 1
      %p166 = scmp.lt.s32.totalorder %s17, 0
      %s167 = scalar_select %p166, %s17, 0
      %s168 = smul.addr %s165, 32
      %s169 = sadd.s32 %s167, %s168
      %s170 = smul.addr %s169, 8
      %s171 = scalar_lea.vmem %s2, %s170
      %p172 = scmp.lt.s32.totalorder %s18, 1
      %s173 = scalar_select %p172, %s18, 1
      %p174 = scmp.lt.s32.totalorder %s17, 0
      %s175 = scalar_select %p174, %s17, 0
      %s176 = smul.addr %s173, 60
      %s177 = sadd.s32 %s175, %s176
      %s178 = smul.addr %s177, 8
      %s179 = scalar_lea.vmem %s0, %s178
      %p180 = scmp.lt.s32.totalorder %s17, 0
      %s181 = scalar_select %p180, %s17, 0
      %s182 = smul.addr %s181, 8
      %s183 = scalar_lea.vmem %s1, %s182
      %p184 = scmp.lt.s32.totalorder %s18, 1
      %s185 = scalar_select %p184, %s18, 1
      %p186 = scmp.lt.s32.totalorder %s17, 0
      %s187 = scalar_select %p186, %s17, 0
      %s188 = smul.addr %s185, 32
      %s189 = sadd.s32 %s187, %s188
      %s190 = smul.addr %s189, 8
      %s191 = scalar_lea.vmem %s2, %s190
      %v192 = vld [vmem:[%s183] sm:$0x1f]
      %v193 = vld [vmem:[%s183 + $0x8] sm:$0x1f]
      %v194 = vld [vmem:[%s183 + $0x10] sm:$0x1f]
      %v195 = vld [vmem:[%s183 + $0x18] sm:$0x1f]
      %v196 = vld [vmem:[%s183 + $0x20] sm:$0x1f]
      %v197 = vld [vmem:[%s179] sm:$0xff]
      %v198 = vld [vmem:[%s179 + $0x8] sm:$0xff]
      %v199 = vld [vmem:[%s179 + $0x18] sm:$0xff]
      %v200 = vld [vmem:[%s179 + $0x20] sm:$0xff]
      %v201 = vld [vmem:[%s179 + $0x30] sm:$0xff]
      %v202 = vld [vmem:[%s179 + $0x38] sm:$0xff]
      %v203 = vld [vmem:[%s179 + $0x48] sm:$0xff]
      %v204 = vld [vmem:[%s179 + $0x50] sm:$0xff]
      %v205 = vld [vmem:[%s179 + $0x60] sm:$0xff]
      %v206 = vld [vmem:[%s179 + $0x68] sm:$0xff]
      %v207 = vld [vmem:[%s179 + $0x78] sm:$0xff]
      %v208 = vld [vmem:[%s179 + $0x80] sm:$0xff]
      %v209 = vld [vmem:[%s179 + $0x90] sm:$0xff]
      %v210 = vld [vmem:[%s179 + $0x98] sm:$0xff]
      %v211 = vld [vmem:[%s179 + $0xa8] sm:$0xff]
      %v212 = vld [vmem:[%s179 + $0xb0] sm:$0xff]
      %v213 = vld [vmem:[%s179 + $0xc0] sm:$0xff]
      %v214 = vld [vmem:[%s179 + $0xc8] sm:$0xff]
      %v215 = vld [vmem:[%s179 + $0xd8] sm:$0xff]
      %v216 = vld [vmem:[%s179 + $0xe0] sm:$0xff]
      %v217 = vld [vmem:[%s179 + $0xf0] sm:$0xff]
      %v218 = vld [vmem:[%s179 + $0xf8] sm:$0xff]
      %v219 = vld [vmem:[%s179 + $0x108] sm:$0xff]
      %v220 = vld [vmem:[%s179 + $0x110] sm:$0xff]
      %v221 = vld [vmem:[%s179 + $0x120] sm:$0xff]
      %v222 = vld [vmem:[%s179 + $0x128] sm:$0xff]
      %v223 = vld [vmem:[%s179 + $0x138] sm:$0xff]
      %v224 = vld [vmem:[%s179 + $0x140] sm:$0xff]
      %v225 = vld [vmem:[%s179 + $0x150] sm:$0xff]
      %v226 = vld [vmem:[%s179 + $0x158] sm:$0xff]
      %v227 = vld [vmem:[%s179 + $0x168] sm:$0xff]
      %v228 = vld [vmem:[%s179 + $0x170] sm:$0xff]
      %v229 = vld [vmem:[%s179 + $0x180] sm:$0xff]
      %v230 = vld [vmem:[%s179 + $0x188] sm:$0xff]
      %v231 = vld [vmem:[%s179 + $0x198] sm:$0xff]
      %v232 = vld [vmem:[%s179 + $0x1a0] sm:$0xff]
      %v233 = vld [vmem:[%s179 + $0x1b0] sm:$0xff]
      %v234 = vld [vmem:[%s179 + $0x1b8] sm:$0xff]
      %v235 = vld [vmem:[%s179 + $0x1c8] sm:$0xff]
      %v236 = vld [vmem:[%s179 + $0x1d0] sm:$0xff]
      %v237 = vlaneseq
      %v238 = vshrl.u32 %v237, 7
      %v239 = vsub.s32 0, %v238
      %v240 = vrot.slane %v192, %v239
      %v241 = vmul.f32 %v197, %v240
      %v242 = vmul.f32 %v198, %v240
      %v243 = vmul.f32 %v199, %v240
      %v244 = vmul.f32 %v200, %v240
      %v245 = vmul.f32 %v201, %v240
      %v246 = vmul.f32 %v202, %v240
      %v247 = vmul.f32 %v203, %v240
      %v248 = vmul.f32 %v204, %v240
      %v249 = vmul.f32 %v205, %v240
      %v250 = vmul.f32 %v206, %v240
      %v251 = vmul.f32 %v207, %v240
      %v252 = vmul.f32 %v208, %v240
      %v253 = vmul.f32 %v209, %v240
      %v254 = vmul.f32 %v210, %v240
      %v255 = vmul.f32 %v211, %v240
      %v256 = vmul.f32 %v212, %v240
      %v257 = vmul.f32 %v213, %v240
      %v258 = vmul.f32 %v214, %v240
      %v259 = vmul.f32 %v215, %v240
      %v260 = vmul.f32 %v216, %v240
      %v261 = vmul.f32 %v217, %v240
      %v262 = vmul.f32 %v218, %v240
      %v263 = vmul.f32 %v219, %v240
      %v264 = vmul.f32 %v220, %v240
      %v265 = vmul.f32 %v221, %v240
      %v266 = vmul.f32 %v222, %v240
      %v267 = vmul.f32 %v223, %v240
      %v268 = vmul.f32 %v224, %v240
      %v269 = vmul.f32 %v225, %v240
      %v270 = vmul.f32 %v226, %v240
      %v271 = vmul.f32 %v227, %v240
      %v272 = vmul.f32 %v228, %v240
      %v273 = vlaneseq
      %v274 = vshrl.u32 %v273, 7
      %v275 = vsub.s32 0, %v274
      %v276 = vrot.slane %v193, %v275
      %v277 = vmul.f32 %v199, %v276
      %v278 = vmul.f32 %v200, %v276
      %v279 = vmul.f32 %v201, %v276
      %v280 = vmul.f32 %v202, %v276
      %v281 = vmul.f32 %v203, %v276
      %v282 = vmul.f32 %v204, %v276
      %v283 = vmul.f32 %v205, %v276
      %v284 = vmul.f32 %v206, %v276
      %v285 = vmul.f32 %v207, %v276
      %v286 = vmul.f32 %v208, %v276
      %v287 = vmul.f32 %v209, %v276
      %v288 = vmul.f32 %v210, %v276
      %v289 = vmul.f32 %v211, %v276
      %v290 = vmul.f32 %v212, %v276
      %v291 = vmul.f32 %v213, %v276
      %v292 = vmul.f32 %v214, %v276
      %v293 = vmul.f32 %v215, %v276
      %v294 = vmul.f32 %v216, %v276
      %v295 = vmul.f32 %v217, %v276
      %v296 = vmul.f32 %v218, %v276
      %v297 = vmul.f32 %v219, %v276
      %v298 = vmul.f32 %v220, %v276
      %v299 = vmul.f32 %v221, %v276
      %v300 = vmul.f32 %v222, %v276
      %v301 = vmul.f32 %v223, %v276
      %v302 = vmul.f32 %v224, %v276
      %v303 = vmul.f32 %v225, %v276
      %v304 = vmul.f32 %v226, %v276
      %v305 = vmul.f32 %v227, %v276
      %v306 = vmul.f32 %v228, %v276
      %v307 = vmul.f32 %v229, %v276
      %v308 = vmul.f32 %v230, %v276
      %v309 = vadd.f32 %v241, %v277
      %v310 = vadd.f32 %v242, %v278
      %v311 = vadd.f32 %v243, %v279
      %v312 = vadd.f32 %v244, %v280
      %v313 = vadd.f32 %v245, %v281
      %v314 = vadd.f32 %v246, %v282
      %v315 = vadd.f32 %v247, %v283
      %v316 = vadd.f32 %v248, %v284
      %v317 = vadd.f32 %v249, %v285
      %v318 = vadd.f32 %v250, %v286
      %v319 = vadd.f32 %v251, %v287
      %v320 = vadd.f32 %v252, %v288
      %v321 = vadd.f32 %v253, %v289
      %v322 = vadd.f32 %v254, %v290
      %v323 = vadd.f32 %v255, %v291
      %v324 = vadd.f32 %v256, %v292
      %v325 = vadd.f32 %v257, %v293
      %v326 = vadd.f32 %v258, %v294
      %v327 = vadd.f32 %v259, %v295
      %v328 = vadd.f32 %v260, %v296
      %v329 = vadd.f32 %v261, %v297
      %v330 = vadd.f32 %v262, %v298
      %v331 = vadd.f32 %v263, %v299
      %v332 = vadd.f32 %v264, %v300
      %v333 = vadd.f32 %v265, %v301
      %v334 = vadd.f32 %v266, %v302
      %v335 = vadd.f32 %v267, %v303
      %v336 = vadd.f32 %v268, %v304
      %v337 = vadd.f32 %v269, %v305
      %v338 = vadd.f32 %v270, %v306
      %v339 = vadd.f32 %v271, %v307
      %v340 = vadd.f32 %v272, %v308
      %v341 = vlaneseq
      %v342 = vshrl.u32 %v341, 7
      %v343 = vsub.s32 0, %v342
      %v344 = vrot.slane %v194, %v343
      %v345 = vmul.f32 %v201, %v344
      %v346 = vmul.f32 %v202, %v344
      %v347 = vmul.f32 %v203, %v344
      %v348 = vmul.f32 %v204, %v344
      %v349 = vmul.f32 %v205, %v344
      %v350 = vmul.f32 %v206, %v344
      %v351 = vmul.f32 %v207, %v344
      %v352 = vmul.f32 %v208, %v344
      %v353 = vmul.f32 %v209, %v344
      %v354 = vmul.f32 %v210, %v344
      %v355 = vmul.f32 %v211, %v344
      %v356 = vmul.f32 %v212, %v344
      %v357 = vmul.f32 %v213, %v344
      %v358 = vmul.f32 %v214, %v344
      %v359 = vmul.f32 %v215, %v344
      %v360 = vmul.f32 %v216, %v344
      %v361 = vmul.f32 %v217, %v344
      %v362 = vmul.f32 %v218, %v344
      %v363 = vmul.f32 %v219, %v344
      %v364 = vmul.f32 %v220, %v344
      %v365 = vmul.f32 %v221, %v344
      %v366 = vmul.f32 %v222, %v344
      %v367 = vmul.f32 %v223, %v344
      %v368 = vmul.f32 %v224, %v344
      %v369 = vmul.f32 %v225, %v344
      %v370 = vmul.f32 %v226, %v344
      %v371 = vmul.f32 %v227, %v344
      %v372 = vmul.f32 %v228, %v344
      %v373 = vmul.f32 %v229, %v344
      %v374 = vmul.f32 %v230, %v344
      %v375 = vmul.f32 %v231, %v344
      %v376 = vmul.f32 %v232, %v344
      %v377 = vadd.f32 %v309, %v345
      %v378 = vadd.f32 %v310, %v346
      %v379 = vadd.f32 %v311, %v347
      %v380 = vadd.f32 %v312, %v348
      %v381 = vadd.f32 %v313, %v349
      %v382 = vadd.f32 %v314, %v350
      %v383 = vadd.f32 %v315, %v351
      %v384 = vadd.f32 %v316, %v352
      %v385 = vadd.f32 %v317, %v353
      %v386 = vadd.f32 %v318, %v354
      %v387 = vadd.f32 %v319, %v355
      %v388 = vadd.f32 %v320, %v356
      %v389 = vadd.f32 %v321, %v357
      %v390 = vadd.f32 %v322, %v358
      %v391 = vadd.f32 %v323, %v359
      %v392 = vadd.f32 %v324, %v360
      %v393 = vadd.f32 %v325, %v361
      %v394 = vadd.f32 %v326, %v362
      %v395 = vadd.f32 %v327, %v363
      %v396 = vadd.f32 %v328, %v364
      %v397 = vadd.f32 %v329, %v365
      %v398 = vadd.f32 %v330, %v366
      %v399 = vadd.f32 %v331, %v367
      %v400 = vadd.f32 %v332, %v368
      %v401 = vadd.f32 %v333, %v369
      %v402 = vadd.f32 %v334, %v370
      %v403 = vadd.f32 %v335, %v371
      %v404 = vadd.f32 %v336, %v372
      %v405 = vadd.f32 %v337, %v373
      %v406 = vadd.f32 %v338, %v374
      %v407 = vadd.f32 %v339, %v375
      %v408 = vadd.f32 %v340, %v376
      %v409 = vlaneseq
      %v410 = vshrl.u32 %v409, 7
      %v411 = vsub.s32 0, %v410
      %v412 = vrot.slane %v195, %v411
      %v413 = vmul.f32 %v203, %v412
      %v414 = vmul.f32 %v204, %v412
      %v415 = vmul.f32 %v205, %v412
      %v416 = vmul.f32 %v206, %v412
      %v417 = vmul.f32 %v207, %v412
      %v418 = vmul.f32 %v208, %v412
      %v419 = vmul.f32 %v209, %v412
      %v420 = vmul.f32 %v210, %v412
      %v421 = vmul.f32 %v211, %v412
      %v422 = vmul.f32 %v212, %v412
      %v423 = vmul.f32 %v213, %v412
      %v424 = vmul.f32 %v214, %v412
      %v425 = vmul.f32 %v215, %v412
      %v426 = vmul.f32 %v216, %v412
      %v427 = vmul.f32 %v217, %v412
      %v428 = vmul.f32 %v218, %v412
      %v429 = vmul.f32 %v219, %v412
      %v430 = vmul.f32 %v220, %v412
      %v431 = vmul.f32 %v221, %v412
      %v432 = vmul.f32 %v222, %v412
      %v433 = vmul.f32 %v223, %v412
      %v434 = vmul.f32 %v224, %v412
      %v435 = vmul.f32 %v225, %v412
      %v436 = vmul.f32 %v226, %v412
      %v437 = vmul.f32 %v227, %v412
      %v438 = vmul.f32 %v228, %v412
      %v439 = vmul.f32 %v229, %v412
      %v440 = vmul.f32 %v230, %v412
      %v441 = vmul.f32 %v231, %v412
      %v442 = vmul.f32 %v232, %v412
      %v443 = vmul.f32 %v233, %v412
      %v444 = vmul.f32 %v234, %v412
      %v445 = vadd.f32 %v377, %v413
      %v446 = vadd.f32 %v378, %v414
      %v447 = vadd.f32 %v379, %v415
      %v448 = vadd.f32 %v380, %v416
      %v449 = vadd.f32 %v381, %v417
      %v450 = vadd.f32 %v382, %v418
      %v451 = vadd.f32 %v383, %v419
      %v452 = vadd.f32 %v384, %v420
      %v453 = vadd.f32 %v385, %v421
      %v454 = vadd.f32 %v386, %v422
      %v455 = vadd.f32 %v387, %v423
      %v456 = vadd.f32 %v388, %v424
      %v457 = vadd.f32 %v389, %v425
      %v458 = vadd.f32 %v390, %v426
      %v459 = vadd.f32 %v391, %v427
      %v460 = vadd.f32 %v392, %v428
      %v461 = vadd.f32 %v393, %v429
      %v462 = vadd.f32 %v394, %v430
      %v463 = vadd.f32 %v395, %v431
      %v464 = vadd.f32 %v396, %v432
      %v465 = vadd.f32 %v397, %v433
      %v466 = vadd.f32 %v398, %v434
      %v467 = vadd.f32 %v399, %v435
      %v468 = vadd.f32 %v400, %v436
      %v469 = vadd.f32 %v401, %v437
      %v470 = vadd.f32 %v402, %v438
      %v471 = vadd.f32 %v403, %v439
      %v472 = vadd.f32 %v404, %v440
      %v473 = vadd.f32 %v405, %v441
      %v474 = vadd.f32 %v406, %v442
      %v475 = vadd.f32 %v407, %v443
      %v476 = vadd.f32 %v408, %v444
      %v477 = vlaneseq
      %v478 = vshrl.u32 %v477, 7
      %v479 = vsub.s32 0, %v478
      %v480 = vrot.slane %v196, %v479
      %v481 = vmul.f32 %v205, %v480
      %v482 = vmul.f32 %v206, %v480
      %v483 = vmul.f32 %v207, %v480
      %v484 = vmul.f32 %v208, %v480
      %v485 = vmul.f32 %v209, %v480
      %v486 = vmul.f32 %v210, %v480
      %v487 = vmul.f32 %v211, %v480
      %v488 = vmul.f32 %v212, %v480
      %v489 = vmul.f32 %v213, %v480
      %v490 = vmul.f32 %v214, %v480
      %v491 = vmul.f32 %v215, %v480
      %v492 = vmul.f32 %v216, %v480
      %v493 = vmul.f32 %v217, %v480
      %v494 = vmul.f32 %v218, %v480
      %v495 = vmul.f32 %v219, %v480
      %v496 = vmul.f32 %v220, %v480
      %v497 = vmul.f32 %v221, %v480
      %v498 = vmul.f32 %v222, %v480
      %v499 = vmul.f32 %v223, %v480
      %v500 = vmul.f32 %v224, %v480
      %v501 = vmul.f32 %v225, %v480
      %v502 = vmul.f32 %v226, %v480
      %v503 = vmul.f32 %v227, %v480
      %v504 = vmul.f32 %v228, %v480
      %v505 = vmul.f32 %v229, %v480
      %v506 = vmul.f32 %v230, %v480
      %v507 = vmul.f32 %v231, %v480
      %v508 = vmul.f32 %v232, %v480
      %v509 = vmul.f32 %v233, %v480
      %v510 = vmul.f32 %v234, %v480
      %v511 = vmul.f32 %v235, %v480
      %v512 = vmul.f32 %v236, %v480
      %v513 = vadd.f32 %v445, %v481
      %v514 = vadd.f32 %v446, %v482
      %v515 = vadd.f32 %v447, %v483
      %v516 = vadd.f32 %v448, %v484
      %v517 = vadd.f32 %v449, %v485
      %v518 = vadd.f32 %v450, %v486
      %v519 = vadd.f32 %v451, %v487
      %v520 = vadd.f32 %v452, %v488
      %v521 = vadd.f32 %v453, %v489
      %v522 = vadd.f32 %v454, %v490
      %v523 = vadd.f32 %v455, %v491
      %v524 = vadd.f32 %v456, %v492
      %v525 = vadd.f32 %v457, %v493
      %v526 = vadd.f32 %v458, %v494
      %v527 = vadd.f32 %v459, %v495
      %v528 = vadd.f32 %v460, %v496
      %v529 = vadd.f32 %v461, %v497
      %v530 = vadd.f32 %v462, %v498
      %v531 = vadd.f32 %v463, %v499
      %v532 = vadd.f32 %v464, %v500
      %v533 = vadd.f32 %v465, %v501
      %v534 = vadd.f32 %v466, %v502
      %v535 = vadd.f32 %v467, %v503
      %v536 = vadd.f32 %v468, %v504
      %v537 = vadd.f32 %v469, %v505
      %v538 = vadd.f32 %v470, %v506
      %v539 = vadd.f32 %v471, %v507
      %v540 = vadd.f32 %v472, %v508
      %v541 = vadd.f32 %v473, %v509
      %v542 = vadd.f32 %v474, %v510
      %v543 = vadd.f32 %v475, %v511
      %v544 = vadd.f32 %v476, %v512
      %v545 = vadd.f32 %v513, 0.0
      %v546 = vadd.f32 %v514, 0.0
      %v547 = vadd.f32 %v515, 0.0
      %v548 = vadd.f32 %v516, 0.0
      %v549 = vadd.f32 %v517, 0.0
      %v550 = vadd.f32 %v518, 0.0
      %v551 = vadd.f32 %v519, 0.0
      %v552 = vadd.f32 %v520, 0.0
      %v553 = vadd.f32 %v521, 0.0
      %v554 = vadd.f32 %v522, 0.0
      %v555 = vadd.f32 %v523, 0.0
      %v556 = vadd.f32 %v524, 0.0
      %v557 = vadd.f32 %v525, 0.0
      %v558 = vadd.f32 %v526, 0.0
      %v559 = vadd.f32 %v527, 0.0
      %v560 = vadd.f32 %v528, 0.0
      %v561 = vadd.f32 %v529, 0.0
      %v562 = vadd.f32 %v530, 0.0
      %v563 = vadd.f32 %v531, 0.0
      %v564 = vadd.f32 %v532, 0.0
      %v565 = vadd.f32 %v533, 0.0
      %v566 = vadd.f32 %v534, 0.0
      %v567 = vadd.f32 %v535, 0.0
      %v568 = vadd.f32 %v536, 0.0
      %v569 = vadd.f32 %v537, 0.0
      %v570 = vadd.f32 %v538, 0.0
      %v571 = vadd.f32 %v539, 0.0
      %v572 = vadd.f32 %v540, 0.0
      %v573 = vadd.f32 %v541, 0.0
      %v574 = vadd.f32 %v542, 0.0
      %v575 = vadd.f32 %v543, 0.0
      %v576 = vadd.f32 %v544, 0.0
      %v577 = vld [vmem:[%s179 + $0x1] sm:$0xff]
      %v578 = vld [vmem:[%s179 + $0x9] sm:$0xff]
      %v579 = vld [vmem:[%s179 + $0x19] sm:$0xff]
      %v580 = vld [vmem:[%s179 + $0x21] sm:$0xff]
      %v581 = vld [vmem:[%s179 + $0x31] sm:$0xff]
      %v582 = vld [vmem:[%s179 + $0x39] sm:$0xff]
      %v583 = vld [vmem:[%s179 + $0x49] sm:$0xff]
      %v584 = vld [vmem:[%s179 + $0x51] sm:$0xff]
      %v585 = vld [vmem:[%s179 + $0x61] sm:$0xff]
      %v586 = vld [vmem:[%s179 + $0x69] sm:$0xff]
      %v587 = vld [vmem:[%s179 + $0x79] sm:$0xff]
      %v588 = vld [vmem:[%s179 + $0x81] sm:$0xff]
      %v589 = vld [vmem:[%s179 + $0x91] sm:$0xff]
      %v590 = vld [vmem:[%s179 + $0x99] sm:$0xff]
      %v591 = vld [vmem:[%s179 + $0xa9] sm:$0xff]
      %v592 = vld [vmem:[%s179 + $0xb1] sm:$0xff]
      %v593 = vld [vmem:[%s179 + $0xc1] sm:$0xff]
      %v594 = vld [vmem:[%s179 + $0xc9] sm:$0xff]
      %v595 = vld [vmem:[%s179 + $0xd9] sm:$0xff]
      %v596 = vld [vmem:[%s179 + $0xe1] sm:$0xff]
      %v597 = vld [vmem:[%s179 + $0xf1] sm:$0xff]
      %v598 = vld [vmem:[%s179 + $0xf9] sm:$0xff]
      %v599 = vld [vmem:[%s179 + $0x109] sm:$0xff]
      %v600 = vld [vmem:[%s179 + $0x111] sm:$0xff]
      %v601 = vld [vmem:[%s179 + $0x121] sm:$0xff]
      %v602 = vld [vmem:[%s179 + $0x129] sm:$0xff]
      %v603 = vld [vmem:[%s179 + $0x139] sm:$0xff]
      %v604 = vld [vmem:[%s179 + $0x141] sm:$0xff]
      %v605 = vld [vmem:[%s179 + $0x151] sm:$0xff]
      %v606 = vld [vmem:[%s179 + $0x159] sm:$0xff]
      %v607 = vld [vmem:[%s179 + $0x169] sm:$0xff]
      %v608 = vld [vmem:[%s179 + $0x171] sm:$0xff]
      %v609 = vld [vmem:[%s179 + $0x181] sm:$0xff]
      %v610 = vld [vmem:[%s179 + $0x189] sm:$0xff]
      %v611 = vld [vmem:[%s179 + $0x199] sm:$0xff]
      %v612 = vld [vmem:[%s179 + $0x1a1] sm:$0xff]
      %v613 = vld [vmem:[%s179 + $0x1b1] sm:$0xff]
      %v614 = vld [vmem:[%s179 + $0x1b9] sm:$0xff]
      %v615 = vld [vmem:[%s179 + $0x1c9] sm:$0xff]
      %v616 = vld [vmem:[%s179 + $0x1d1] sm:$0xff]
      %v617 = vlaneseq
      %v618 = vshrl.u32 %v617, 7
      %v619 = vsub.s32 1, %v618
      %v620 = vrot.slane %v192, %v619
      %v621 = vmul.f32 %v577, %v620
      %v622 = vmul.f32 %v578, %v620
      %v623 = vmul.f32 %v579, %v620
      %v624 = vmul.f32 %v580, %v620
      %v625 = vmul.f32 %v581, %v620
      %v626 = vmul.f32 %v582, %v620
      %v627 = vmul.f32 %v583, %v620
      %v628 = vmul.f32 %v584, %v620
      %v629 = vmul.f32 %v585, %v620
      %v630 = vmul.f32 %v586, %v620
      %v631 = vmul.f32 %v587, %v620
      %v632 = vmul.f32 %v588, %v620
      %v633 = vmul.f32 %v589, %v620
      %v634 = vmul.f32 %v590, %v620
      %v635 = vmul.f32 %v591, %v620
      %v636 = vmul.f32 %v592, %v620
      %v637 = vmul.f32 %v593, %v620
      %v638 = vmul.f32 %v594, %v620
      %v639 = vmul.f32 %v595, %v620
      %v640 = vmul.f32 %v596, %v620
      %v641 = vmul.f32 %v597, %v620
      %v642 = vmul.f32 %v598, %v620
      %v643 = vmul.f32 %v599, %v620
      %v644 = vmul.f32 %v600, %v620
      %v645 = vmul.f32 %v601, %v620
      %v646 = vmul.f32 %v602, %v620
      %v647 = vmul.f32 %v603, %v620
      %v648 = vmul.f32 %v604, %v620
      %v649 = vmul.f32 %v605, %v620
      %v650 = vmul.f32 %v606, %v620
      %v651 = vmul.f32 %v607, %v620
      %v652 = vmul.f32 %v608, %v620
      %v653 = vlaneseq
      %v654 = vshrl.u32 %v653, 7
      %v655 = vsub.s32 1, %v654
      %v656 = vrot.slane %v193, %v655
      %v657 = vmul.f32 %v579, %v656
      %v658 = vmul.f32 %v580, %v656
      %v659 = vmul.f32 %v581, %v656
      %v660 = vmul.f32 %v582, %v656
      %v661 = vmul.f32 %v583, %v656
      %v662 = vmul.f32 %v584, %v656
      %v663 = vmul.f32 %v585, %v656
      %v664 = vmul.f32 %v586, %v656
      %v665 = vmul.f32 %v587, %v656
      %v666 = vmul.f32 %v588, %v656
      %v667 = vmul.f32 %v589, %v656
      %v668 = vmul.f32 %v590, %v656
      %v669 = vmul.f32 %v591, %v656
      %v670 = vmul.f32 %v592, %v656
      %v671 = vmul.f32 %v593, %v656
      %v672 = vmul.f32 %v594, %v656
      %v673 = vmul.f32 %v595, %v656
      %v674 = vmul.f32 %v596, %v656
      %v675 = vmul.f32 %v597, %v656
      %v676 = vmul.f32 %v598, %v656
      %v677 = vmul.f32 %v599, %v656
      %v678 = vmul.f32 %v600, %v656
      %v679 = vmul.f32 %v601, %v656
      %v680 = vmul.f32 %v602, %v656
      %v681 = vmul.f32 %v603, %v656
      %v682 = vmul.f32 %v604, %v656
      %v683 = vmul.f32 %v605, %v656
      %v684 = vmul.f32 %v606, %v656
      %v685 = vmul.f32 %v607, %v656
      %v686 = vmul.f32 %v608, %v656
      %v687 = vmul.f32 %v609, %v656
      %v688 = vmul.f32 %v610, %v656
      %v689 = vadd.f32 %v621, %v657
      %v690 = vadd.f32 %v622, %v658
      %v691 = vadd.f32 %v623, %v659
      %v692 = vadd.f32 %v624, %v660
      %v693 = vadd.f32 %v625, %v661
      %v694 = vadd.f32 %v626, %v662
      %v695 = vadd.f32 %v627, %v663
      %v696 = vadd.f32 %v628, %v664
      %v697 = vadd.f32 %v629, %v665
      %v698 = vadd.f32 %v630, %v666
      %v699 = vadd.f32 %v631, %v667
      %v700 = vadd.f32 %v632, %v668
      %v701 = vadd.f32 %v633, %v669
      %v702 = vadd.f32 %v634, %v670
      %v703 = vadd.f32 %v635, %v671
      %v704 = vadd.f32 %v636, %v672
      %v705 = vadd.f32 %v637, %v673
      %v706 = vadd.f32 %v638, %v674
      %v707 = vadd.f32 %v639, %v675
      %v708 = vadd.f32 %v640, %v676
      %v709 = vadd.f32 %v641, %v677
      %v710 = vadd.f32 %v642, %v678
      %v711 = vadd.f32 %v643, %v679
      %v712 = vadd.f32 %v644, %v680
      %v713 = vadd.f32 %v645, %v681
      %v714 = vadd.f32 %v646, %v682
      %v715 = vadd.f32 %v647, %v683
      %v716 = vadd.f32 %v648, %v684
      %v717 = vadd.f32 %v649, %v685
      %v718 = vadd.f32 %v650, %v686
      %v719 = vadd.f32 %v651, %v687
      %v720 = vadd.f32 %v652, %v688
      %v721 = vlaneseq
      %v722 = vshrl.u32 %v721, 7
      %v723 = vsub.s32 1, %v722
      %v724 = vrot.slane %v194, %v723
      %v725 = vmul.f32 %v581, %v724
      %v726 = vmul.f32 %v582, %v724
      %v727 = vmul.f32 %v583, %v724
      %v728 = vmul.f32 %v584, %v724
      %v729 = vmul.f32 %v585, %v724
      %v730 = vmul.f32 %v586, %v724
      %v731 = vmul.f32 %v587, %v724
      %v732 = vmul.f32 %v588, %v724
      %v733 = vmul.f32 %v589, %v724
      %v734 = vmul.f32 %v590, %v724
      %v735 = vmul.f32 %v591, %v724
      %v736 = vmul.f32 %v592, %v724
      %v737 = vmul.f32 %v593, %v724
      %v738 = vmul.f32 %v594, %v724
      %v739 = vmul.f32 %v595, %v724
      %v740 = vmul.f32 %v596, %v724
      %v741 = vmul.f32 %v597, %v724
      %v742 = vmul.f32 %v598, %v724
      %v743 = vmul.f32 %v599, %v724
      %v744 = vmul.f32 %v600, %v724
      %v745 = vmul.f32 %v601, %v724
      %v746 = vmul.f32 %v602, %v724
      %v747 = vmul.f32 %v603, %v724
      %v748 = vmul.f32 %v604, %v724
      %v749 = vmul.f32 %v605, %v724
      %v750 = vmul.f32 %v606, %v724
      %v751 = vmul.f32 %v607, %v724
      %v752 = vmul.f32 %v608, %v724
      %v753 = vmul.f32 %v609, %v724
      %v754 = vmul.f32 %v610, %v724
      %v755 = vmul.f32 %v611, %v724
      %v756 = vmul.f32 %v612, %v724
      %v757 = vadd.f32 %v689, %v725
      %v758 = vadd.f32 %v690, %v726
      %v759 = vadd.f32 %v691, %v727
      %v760 = vadd.f32 %v692, %v728
      %v761 = vadd.f32 %v693, %v729
      %v762 = vadd.f32 %v694, %v730
      %v763 = vadd.f32 %v695, %v731
      %v764 = vadd.f32 %v696, %v732
      %v765 = vadd.f32 %v697, %v733
      %v766 = vadd.f32 %v698, %v734
      %v767 = vadd.f32 %v699, %v735
      %v768 = vadd.f32 %v700, %v736
      %v769 = vadd.f32 %v701, %v737
      %v770 = vadd.f32 %v702, %v738
      %v771 = vadd.f32 %v703, %v739
      %v772 = vadd.f32 %v704, %v740
      %v773 = vadd.f32 %v705, %v741
      %v774 = vadd.f32 %v706, %v742
      %v775 = vadd.f32 %v707, %v743
      %v776 = vadd.f32 %v708, %v744
      %v777 = vadd.f32 %v709, %v745
      %v778 = vadd.f32 %v710, %v746
      %v779 = vadd.f32 %v711, %v747
      %v780 = vadd.f32 %v712, %v748
      %v781 = vadd.f32 %v713, %v749
      %v782 = vadd.f32 %v714, %v750
      %v783 = vadd.f32 %v715, %v751
      %v784 = vadd.f32 %v716, %v752
      %v785 = vadd.f32 %v717, %v753
      %v786 = vadd.f32 %v718, %v754
      %v787 = vadd.f32 %v719, %v755
      %v788 = vadd.f32 %v720, %v756
      %v789 = vlaneseq
      %v790 = vshrl.u32 %v789, 7
      %v791 = vsub.s32 1, %v790
      %v792 = vrot.slane %v195, %v791
      %v793 = vmul.f32 %v583, %v792
      %v794 = vmul.f32 %v584, %v792
      %v795 = vmul.f32 %v585, %v792
      %v796 = vmul.f32 %v586, %v792
      %v797 = vmul.f32 %v587, %v792
      %v798 = vmul.f32 %v588, %v792
      %v799 = vmul.f32 %v589, %v792
      %v800 = vmul.f32 %v590, %v792
      %v801 = vmul.f32 %v591, %v792
      %v802 = vmul.f32 %v592, %v792
      %v803 = vmul.f32 %v593, %v792
      %v804 = vmul.f32 %v594, %v792
      %v805 = vmul.f32 %v595, %v792
      %v806 = vmul.f32 %v596, %v792
      %v807 = vmul.f32 %v597, %v792
      %v808 = vmul.f32 %v598, %v792
      %v809 = vmul.f32 %v599, %v792
      %v810 = vmul.f32 %v600, %v792
      %v811 = vmul.f32 %v601, %v792
      %v812 = vmul.f32 %v602, %v792
      %v813 = vmul.f32 %v603, %v792
      %v814 = vmul.f32 %v604, %v792
      %v815 = vmul.f32 %v605, %v792
      %v816 = vmul.f32 %v606, %v792
      %v817 = vmul.f32 %v607, %v792
      %v818 = vmul.f32 %v608, %v792
      %v819 = vmul.f32 %v609, %v792
      %v820 = vmul.f32 %v610, %v792
      %v821 = vmul.f32 %v611, %v792
      %v822 = vmul.f32 %v612, %v792
      %v823 = vmul.f32 %v613, %v792
      %v824 = vmul.f32 %v614, %v792
      %v825 = vadd.f32 %v757, %v793
      %v826 = vadd.f32 %v758, %v794
      %v827 = vadd.f32 %v759, %v795
      %v828 = vadd.f32 %v760, %v796
      %v829 = vadd.f32 %v761, %v797
      %v830 = vadd.f32 %v762, %v798
      %v831 = vadd.f32 %v763, %v799
      %v832 = vadd.f32 %v764, %v800
      %v833 = vadd.f32 %v765, %v801
      %v834 = vadd.f32 %v766, %v802
      %v835 = vadd.f32 %v767, %v803
      %v836 = vadd.f32 %v768, %v804
      %v837 = vadd.f32 %v769, %v805
      %v838 = vadd.f32 %v770, %v806
      %v839 = vadd.f32 %v771, %v807
      %v840 = vadd.f32 %v772, %v808
      %v841 = vadd.f32 %v773, %v809
      %v842 = vadd.f32 %v774, %v810
      %v843 = vadd.f32 %v775, %v811
      %v844 = vadd.f32 %v776, %v812
      %v845 = vadd.f32 %v777, %v813
      %v846 = vadd.f32 %v778, %v814
      %v847 = vadd.f32 %v779, %v815
      %v848 = vadd.f32 %v780, %v816
      %v849 = vadd.f32 %v781, %v817
      %v850 = vadd.f32 %v782, %v818
      %v851 = vadd.f32 %v783, %v819
      %v852 = vadd.f32 %v784, %v820
      %v853 = vadd.f32 %v785, %v821
      %v854 = vadd.f32 %v786, %v822
      %v855 = vadd.f32 %v787, %v823
      %v856 = vadd.f32 %v788, %v824
      %v857 = vlaneseq
      %v858 = vshrl.u32 %v857, 7
      %v859 = vsub.s32 1, %v858
      %v860 = vrot.slane %v196, %v859
      %v861 = vmul.f32 %v585, %v860
      %v862 = vmul.f32 %v586, %v860
      %v863 = vmul.f32 %v587, %v860
      %v864 = vmul.f32 %v588, %v860
      %v865 = vmul.f32 %v589, %v860
      %v866 = vmul.f32 %v590, %v860
      %v867 = vmul.f32 %v591, %v860
      %v868 = vmul.f32 %v592, %v860
      %v869 = vmul.f32 %v593, %v860
      %v870 = vmul.f32 %v594, %v860
      %v871 = vmul.f32 %v595, %v860
      %v872 = vmul.f32 %v596, %v860
      %v873 = vmul.f32 %v597, %v860
      %v874 = vmul.f32 %v598, %v860
      %v875 = vmul.f32 %v599, %v860
      %v876 = vmul.f32 %v600, %v860
      %v877 = vmul.f32 %v601, %v860
      %v878 = vmul.f32 %v602, %v860
      %v879 = vmul.f32 %v603, %v860
      %v880 = vmul.f32 %v604, %v860
      %v881 = vmul.f32 %v605, %v860
      %v882 = vmul.f32 %v606, %v860
      %v883 = vmul.f32 %v607, %v860
      %v884 = vmul.f32 %v608, %v860
      %v885 = vmul.f32 %v609, %v860
      %v886 = vmul.f32 %v610, %v860
      %v887 = vmul.f32 %v611, %v860
      %v888 = vmul.f32 %v612, %v860
      %v889 = vmul.f32 %v613, %v860
      %v890 = vmul.f32 %v614, %v860
      %v891 = vmul.f32 %v615, %v860
      %v892 = vmul.f32 %v616, %v860
      %v893 = vadd.f32 %v825, %v861
      %v894 = vadd.f32 %v826, %v862
      %v895 = vadd.f32 %v827, %v863
      %v896 = vadd.f32 %v828, %v864
      %v897 = vadd.f32 %v829, %v865
      %v898 = vadd.f32 %v830, %v866
      %v899 = vadd.f32 %v831, %v867
      %v900 = vadd.f32 %v832, %v868
      %v901 = vadd.f32 %v833, %v869
      %v902 = vadd.f32 %v834, %v870
      %v903 = vadd.f32 %v835, %v871
      %v904 = vadd.f32 %v836, %v872
      %v905 = vadd.f32 %v837, %v873
      %v906 = vadd.f32 %v838, %v874
      %v907 = vadd.f32 %v839, %v875
      %v908 = vadd.f32 %v840, %v876
      %v909 = vadd.f32 %v841, %v877
      %v910 = vadd.f32 %v842, %v878
      %v911 = vadd.f32 %v843, %v879
      %v912 = vadd.f32 %v844, %v880
      %v913 = vadd.f32 %v845, %v881
      %v914 = vadd.f32 %v846, %v882
      %v915 = vadd.f32 %v847, %v883
      %v916 = vadd.f32 %v848, %v884
      %v917 = vadd.f32 %v849, %v885
      %v918 = vadd.f32 %v850, %v886
      %v919 = vadd.f32 %v851, %v887
      %v920 = vadd.f32 %v852, %v888
      %v921 = vadd.f32 %v853, %v889
      %v922 = vadd.f32 %v854, %v890
      %v923 = vadd.f32 %v855, %v891
      %v924 = vadd.f32 %v856, %v892
      %v925 = vadd.f32 %v545, %v893
      %v926 = vadd.f32 %v546, %v894
      %v927 = vadd.f32 %v547, %v895
      %v928 = vadd.f32 %v548, %v896
      %v929 = vadd.f32 %v549, %v897
      %v930 = vadd.f32 %v550, %v898
      %v931 = vadd.f32 %v551, %v899
      %v932 = vadd.f32 %v552, %v900
      %v933 = vadd.f32 %v553, %v901
      %v934 = vadd.f32 %v554, %v902
      %v935 = vadd.f32 %v555, %v903
      %v936 = vadd.f32 %v556, %v904
      %v937 = vadd.f32 %v557, %v905
      %v938 = vadd.f32 %v558, %v906
      %v939 = vadd.f32 %v559, %v907
      %v940 = vadd.f32 %v560, %v908
      %v941 = vadd.f32 %v561, %v909
      %v942 = vadd.f32 %v562, %v910
      %v943 = vadd.f32 %v563, %v911
      %v944 = vadd.f32 %v564, %v912
      %v945 = vadd.f32 %v565, %v913
      %v946 = vadd.f32 %v566, %v914
      %v947 = vadd.f32 %v567, %v915
      %v948 = vadd.f32 %v568, %v916
      %v949 = vadd.f32 %v569, %v917
      %v950 = vadd.f32 %v570, %v918
      %v951 = vadd.f32 %v571, %v919
      %v952 = vadd.f32 %v572, %v920
      %v953 = vadd.f32 %v573, %v921
      %v954 = vadd.f32 %v574, %v922
      %v955 = vadd.f32 %v575, %v923
      %v956 = vadd.f32 %v576, %v924
      %v957 = vld [vmem:[%s179 + $0x2] sm:$0xff]
      %v958 = vld [vmem:[%s179 + $0xa] sm:$0xff]
      %v959 = vld [vmem:[%s179 + $0x1a] sm:$0xff]
      %v960 = vld [vmem:[%s179 + $0x22] sm:$0xff]
      %v961 = vld [vmem:[%s179 + $0x32] sm:$0xff]
      %v962 = vld [vmem:[%s179 + $0x3a] sm:$0xff]
      %v963 = vld [vmem:[%s179 + $0x4a] sm:$0xff]
      %v964 = vld [vmem:[%s179 + $0x52] sm:$0xff]
      %v965 = vld [vmem:[%s179 + $0x62] sm:$0xff]
      %v966 = vld [vmem:[%s179 + $0x6a] sm:$0xff]
      %v967 = vld [vmem:[%s179 + $0x7a] sm:$0xff]
      %v968 = vld [vmem:[%s179 + $0x82] sm:$0xff]
      %v969 = vld [vmem:[%s179 + $0x92] sm:$0xff]
      %v970 = vld [vmem:[%s179 + $0x9a] sm:$0xff]
      %v971 = vld [vmem:[%s179 + $0xaa] sm:$0xff]
      %v972 = vld [vmem:[%s179 + $0xb2] sm:$0xff]
      %v973 = vld [vmem:[%s179 + $0xc2] sm:$0xff]
      %v974 = vld [vmem:[%s179 + $0xca] sm:$0xff]
      %v975 = vld [vmem:[%s179 + $0xda] sm:$0xff]
      %v976 = vld [vmem:[%s179 + $0xe2] sm:$0xff]
      %v977 = vld [vmem:[%s179 + $0xf2] sm:$0xff]
      %v978 = vld [vmem:[%s179 + $0xfa] sm:$0xff]
      %v979 = vld [vmem:[%s179 + $0x10a] sm:$0xff]
      %v980 = vld [vmem:[%s179 + $0x112] sm:$0xff]
      %v981 = vld [vmem:[%s179 + $0x122] sm:$0xff]
      %v982 = vld [vmem:[%s179 + $0x12a] sm:$0xff]
      %v983 = vld [vmem:[%s179 + $0x13a] sm:$0xff]
      %v984 = vld [vmem:[%s179 + $0x142] sm:$0xff]
      %v985 = vld [vmem:[%s179 + $0x152] sm:$0xff]
      %v986 = vld [vmem:[%s179 + $0x15a] sm:$0xff]
      %v987 = vld [vmem:[%s179 + $0x16a] sm:$0xff]
      %v988 = vld [vmem:[%s179 + $0x172] sm:$0xff]
      %v989 = vld [vmem:[%s179 + $0x182] sm:$0xff]
      %v990 = vld [vmem:[%s179 + $0x18a] sm:$0xff]
      %v991 = vld [vmem:[%s179 + $0x19a] sm:$0xff]
      %v992 = vld [vmem:[%s179 + $0x1a2] sm:$0xff]
      %v993 = vld [vmem:[%s179 + $0x1b2] sm:$0xff]
      %v994 = vld [vmem:[%s179 + $0x1ba] sm:$0xff]
      %v995 = vld [vmem:[%s179 + $0x1ca] sm:$0xff]
      %v996 = vld [vmem:[%s179 + $0x1d2] sm:$0xff]
      %v997 = vlaneseq
      %v998 = vshrl.u32 %v997, 7
      %v999 = vsub.s32 2, %v998
      %v1000 = vrot.slane %v192, %v999
      %v1001 = vmul.f32 %v957, %v1000
      %v1002 = vmul.f32 %v958, %v1000
      %v1003 = vmul.f32 %v959, %v1000
      %v1004 = vmul.f32 %v960, %v1000
      %v1005 = vmul.f32 %v961, %v1000
      %v1006 = vmul.f32 %v962, %v1000
      %v1007 = vmul.f32 %v963, %v1000
      %v1008 = vmul.f32 %v964, %v1000
      %v1009 = vmul.f32 %v965, %v1000
      %v1010 = vmul.f32 %v966, %v1000
      %v1011 = vmul.f32 %v967, %v1000
      %v1012 = vmul.f32 %v968, %v1000
      %v1013 = vmul.f32 %v969, %v1000
      %v1014 = vmul.f32 %v970, %v1000
      %v1015 = vmul.f32 %v971, %v1000
      %v1016 = vmul.f32 %v972, %v1000
      %v1017 = vmul.f32 %v973, %v1000
      %v1018 = vmul.f32 %v974, %v1000
      %v1019 = vmul.f32 %v975, %v1000
      %v1020 = vmul.f32 %v976, %v1000
      %v1021 = vmul.f32 %v977, %v1000
      %v1022 = vmul.f32 %v978, %v1000
      %v1023 = vmul.f32 %v979, %v1000
      %v1024 = vmul.f32 %v980, %v1000
      %v1025 = vmul.f32 %v981, %v1000
      %v1026 = vmul.f32 %v982, %v1000
      %v1027 = vmul.f32 %v983, %v1000
      %v1028 = vmul.f32 %v984, %v1000
      %v1029 = vmul.f32 %v985, %v1000
      %v1030 = vmul.f32 %v986, %v1000
      %v1031 = vmul.f32 %v987, %v1000
      %v1032 = vmul.f32 %v988, %v1000
      %v1033 = vlaneseq
      %v1034 = vshrl.u32 %v1033, 7
      %v1035 = vsub.s32 2, %v1034
      %v1036 = vrot.slane %v193, %v1035
      %v1037 = vmul.f32 %v959, %v1036
      %v1038 = vmul.f32 %v960, %v1036
      %v1039 = vmul.f32 %v961, %v1036
      %v1040 = vmul.f32 %v962, %v1036
      %v1041 = vmul.f32 %v963, %v1036
      %v1042 = vmul.f32 %v964, %v1036
      %v1043 = vmul.f32 %v965, %v1036
      %v1044 = vmul.f32 %v966, %v1036
      %v1045 = vmul.f32 %v967, %v1036
      %v1046 = vmul.f32 %v968, %v1036
      %v1047 = vmul.f32 %v969, %v1036
      %v1048 = vmul.f32 %v970, %v1036
      %v1049 = vmul.f32 %v971, %v1036
      %v1050 = vmul.f32 %v972, %v1036
      %v1051 = vmul.f32 %v973, %v1036
      %v1052 = vmul.f32 %v974, %v1036
      %v1053 = vmul.f32 %v975, %v1036
      %v1054 = vmul.f32 %v976, %v1036
      %v1055 = vmul.f32 %v977, %v1036
      %v1056 = vmul.f32 %v978, %v1036
      %v1057 = vmul.f32 %v979, %v1036
      %v1058 = vmul.f32 %v980, %v1036
      %v1059 = vmul.f32 %v981, %v1036
      %v1060 = vmul.f32 %v982, %v1036
      %v1061 = vmul.f32 %v983, %v1036
      %v1062 = vmul.f32 %v984, %v1036
      %v1063 = vmul.f32 %v985, %v1036
      %v1064 = vmul.f32 %v986, %v1036
      %v1065 = vmul.f32 %v987, %v1036
      %v1066 = vmul.f32 %v988, %v1036
      %v1067 = vmul.f32 %v989, %v1036
      %v1068 = vmul.f32 %v990, %v1036
      %v1069 = vadd.f32 %v1001, %v1037
      %v1070 = vadd.f32 %v1002, %v1038
      %v1071 = vadd.f32 %v1003, %v1039
      %v1072 = vadd.f32 %v1004, %v1040
      %v1073 = vadd.f32 %v1005, %v1041
      %v1074 = vadd.f32 %v1006, %v1042
      %v1075 = vadd.f32 %v1007, %v1043
      %v1076 = vadd.f32 %v1008, %v1044
      %v1077 = vadd.f32 %v1009, %v1045
      %v1078 = vadd.f32 %v1010, %v1046
      %v1079 = vadd.f32 %v1011, %v1047
      %v1080 = vadd.f32 %v1012, %v1048
      %v1081 = vadd.f32 %v1013, %v1049
      %v1082 = vadd.f32 %v1014, %v1050
      %v1083 = vadd.f32 %v1015, %v1051
      %v1084 = vadd.f32 %v1016, %v1052
      %v1085 = vadd.f32 %v1017, %v1053
      %v1086 = vadd.f32 %v1018, %v1054
      %v1087 = vadd.f32 %v1019, %v1055
      %v1088 = vadd.f32 %v1020, %v1056
      %v1089 = vadd.f32 %v1021, %v1057
      %v1090 = vadd.f32 %v1022, %v1058
      %v1091 = vadd.f32 %v1023, %v1059
      %v1092 = vadd.f32 %v1024, %v1060
      %v1093 = vadd.f32 %v1025, %v1061
      %v1094 = vadd.f32 %v1026, %v1062
      %v1095 = vadd.f32 %v1027, %v1063
      %v1096 = vadd.f32 %v1028, %v1064
      %v1097 = vadd.f32 %v1029, %v1065
      %v1098 = vadd.f32 %v1030, %v1066
      %v1099 = vadd.f32 %v1031, %v1067
      %v1100 = vadd.f32 %v1032, %v1068
      %v1101 = vlaneseq
      %v1102 = vshrl.u32 %v1101, 7
      %v1103 = vsub.s32 2, %v1102
      %v1104 = vrot.slane %v194, %v1103
      %v1105 = vmul.f32 %v961, %v1104
      %v1106 = vmul.f32 %v962, %v1104
      %v1107 = vmul.f32 %v963, %v1104
      %v1108 = vmul.f32 %v964, %v1104
      %v1109 = vmul.f32 %v965, %v1104
      %v1110 = vmul.f32 %v966, %v1104
      %v1111 = vmul.f32 %v967, %v1104
      %v1112 = vmul.f32 %v968, %v1104
      %v1113 = vmul.f32 %v969, %v1104
      %v1114 = vmul.f32 %v970, %v1104
      %v1115 = vmul.f32 %v971, %v1104
      %v1116 = vmul.f32 %v972, %v1104
      %v1117 = vmul.f32 %v973, %v1104
      %v1118 = vmul.f32 %v974, %v1104
      %v1119 = vmul.f32 %v975, %v1104
      %v1120 = vmul.f32 %v976, %v1104
      %v1121 = vmul.f32 %v977, %v1104
      %v1122 = vmul.f32 %v978, %v1104
      %v1123 = vmul.f32 %v979, %v1104
      %v1124 = vmul.f32 %v980, %v1104
      %v1125 = vmul.f32 %v981, %v1104
      %v1126 = vmul.f32 %v982, %v1104
      %v1127 = vmul.f32 %v983, %v1104
      %v1128 = vmul.f32 %v984, %v1104
      %v1129 = vmul.f32 %v985, %v1104
      %v1130 = vmul.f32 %v986, %v1104
      %v1131 = vmul.f32 %v987, %v1104
      %v1132 = vmul.f32 %v988, %v1104
      %v1133 = vmul.f32 %v989, %v1104
      %v1134 = vmul.f32 %v990, %v1104
      %v1135 = vmul.f32 %v991, %v1104
      %v1136 = vmul.f32 %v992, %v1104
      %v1137 = vadd.f32 %v1069, %v1105
      %v1138 = vadd.f32 %v1070, %v1106
      %v1139 = vadd.f32 %v1071, %v1107
      %v1140 = vadd.f32 %v1072, %v1108
      %v1141 = vadd.f32 %v1073, %v1109
      %v1142 = vadd.f32 %v1074, %v1110
      %v1143 = vadd.f32 %v1075, %v1111
      %v1144 = vadd.f32 %v1076, %v1112
      %v1145 = vadd.f32 %v1077, %v1113
      %v1146 = vadd.f32 %v1078, %v1114
      %v1147 = vadd.f32 %v1079, %v1115
      %v1148 = vadd.f32 %v1080, %v1116
      %v1149 = vadd.f32 %v1081, %v1117
      %v1150 = vadd.f32 %v1082, %v1118
      %v1151 = vadd.f32 %v1083, %v1119
      %v1152 = vadd.f32 %v1084, %v1120
      %v1153 = vadd.f32 %v1085, %v1121
      %v1154 = vadd.f32 %v1086, %v1122
      %v1155 = vadd.f32 %v1087, %v1123
      %v1156 = vadd.f32 %v1088, %v1124
      %v1157 = vadd.f32 %v1089, %v1125
      %v1158 = vadd.f32 %v1090, %v1126
      %v1159 = vadd.f32 %v1091, %v1127
      %v1160 = vadd.f32 %v1092, %v1128
      %v1161 = vadd.f32 %v1093, %v1129
      %v1162 = vadd.f32 %v1094, %v1130
      %v1163 = vadd.f32 %v1095, %v1131
      %v1164 = vadd.f32 %v1096, %v1132
      %v1165 = vadd.f32 %v1097, %v1133
      %v1166 = vadd.f32 %v1098, %v1134
      %v1167 = vadd.f32 %v1099, %v1135
      %v1168 = vadd.f32 %v1100, %v1136
      %v1169 = vlaneseq
      %v1170 = vshrl.u32 %v1169, 7
      %v1171 = vsub.s32 2, %v1170
      %v1172 = vrot.slane %v195, %v1171
      %v1173 = vmul.f32 %v963, %v1172
      %v1174 = vmul.f32 %v964, %v1172
      %v1175 = vmul.f32 %v965, %v1172
      %v1176 = vmul.f32 %v966, %v1172
      %v1177 = vmul.f32 %v967, %v1172
      %v1178 = vmul.f32 %v968, %v1172
      %v1179 = vmul.f32 %v969, %v1172
      %v1180 = vmul.f32 %v970, %v1172
      %v1181 = vmul.f32 %v971, %v1172
      %v1182 = vmul.f32 %v972, %v1172
      %v1183 = vmul.f32 %v973, %v1172
      %v1184 = vmul.f32 %v974, %v1172
      %v1185 = vmul.f32 %v975, %v1172
      %v1186 = vmul.f32 %v976, %v1172
      %v1187 = vmul.f32 %v977, %v1172
      %v1188 = vmul.f32 %v978, %v1172
      %v1189 = vmul.f32 %v979, %v1172
      %v1190 = vmul.f32 %v980, %v1172
      %v1191 = vmul.f32 %v981, %v1172
      %v1192 = vmul.f32 %v982, %v1172
      %v1193 = vmul.f32 %v983, %v1172
      %v1194 = vmul.f32 %v984, %v1172
      %v1195 = vmul.f32 %v985, %v1172
      %v1196 = vmul.f32 %v986, %v1172
      %v1197 = vmul.f32 %v987, %v1172
      %v1198 = vmul.f32 %v988, %v1172
      %v1199 = vmul.f32 %v989, %v1172
      %v1200 = vmul.f32 %v990, %v1172
      %v1201 = vmul.f32 %v991, %v1172
      %v1202 = vmul.f32 %v992, %v1172
      %v1203 = vmul.f32 %v993, %v1172
      %v1204 = vmul.f32 %v994, %v1172
      %v1205 = vadd.f32 %v1137, %v1173
      %v1206 = vadd.f32 %v1138, %v1174
      %v1207 = vadd.f32 %v1139, %v1175
      %v1208 = vadd.f32 %v1140, %v1176
      %v1209 = vadd.f32 %v1141, %v1177
      %v1210 = vadd.f32 %v1142, %v1178
      %v1211 = vadd.f32 %v1143, %v1179
      %v1212 = vadd.f32 %v1144, %v1180
      %v1213 = vadd.f32 %v1145, %v1181
      %v1214 = vadd.f32 %v1146, %v1182
      %v1215 = vadd.f32 %v1147, %v1183
      %v1216 = vadd.f32 %v1148, %v1184
      %v1217 = vadd.f32 %v1149, %v1185
      %v1218 = vadd.f32 %v1150, %v1186
      %v1219 = vadd.f32 %v1151, %v1187
      %v1220 = vadd.f32 %v1152, %v1188
      %v1221 = vadd.f32 %v1153, %v1189
      %v1222 = vadd.f32 %v1154, %v1190
      %v1223 = vadd.f32 %v1155, %v1191
      %v1224 = vadd.f32 %v1156, %v1192
      %v1225 = vadd.f32 %v1157, %v1193
      %v1226 = vadd.f32 %v1158, %v1194
      %v1227 = vadd.f32 %v1159, %v1195
      %v1228 = vadd.f32 %v1160, %v1196
      %v1229 = vadd.f32 %v1161, %v1197
      %v1230 = vadd.f32 %v1162, %v1198
      %v1231 = vadd.f32 %v1163, %v1199
      %v1232 = vadd.f32 %v1164, %v1200
      %v1233 = vadd.f32 %v1165, %v1201
      %v1234 = vadd.f32 %v1166, %v1202
      %v1235 = vadd.f32 %v1167, %v1203
      %v1236 = vadd.f32 %v1168, %v1204
      %v1237 = vlaneseq
      %v1238 = vshrl.u32 %v1237, 7
      %v1239 = vsub.s32 2, %v1238
      %v1240 = vrot.slane %v196, %v1239
      %v1241 = vmul.f32 %v965, %v1240
      %v1242 = vmul.f32 %v966, %v1240
      %v1243 = vmul.f32 %v967, %v1240
      %v1244 = vmul.f32 %v968, %v1240
      %v1245 = vmul.f32 %v969, %v1240
      %v1246 = vmul.f32 %v970, %v1240
      %v1247 = vmul.f32 %v971, %v1240
      %v1248 = vmul.f32 %v972, %v1240
      %v1249 = vmul.f32 %v973, %v1240
      %v1250 = vmul.f32 %v974, %v1240
      %v1251 = vmul.f32 %v975, %v1240
      %v1252 = vmul.f32 %v976, %v1240
      %v1253 = vmul.f32 %v977, %v1240
      %v1254 = vmul.f32 %v978, %v1240
      %v1255 = vmul.f32 %v979, %v1240
      %v1256 = vmul.f32 %v980, %v1240
      %v1257 = vmul.f32 %v981, %v1240
      %v1258 = vmul.f32 %v982, %v1240
      %v1259 = vmul.f32 %v983, %v1240
      %v1260 = vmul.f32 %v984, %v1240
      %v1261 = vmul.f32 %v985, %v1240
      %v1262 = vmul.f32 %v986, %v1240
      %v1263 = vmul.f32 %v987, %v1240
      %v1264 = vmul.f32 %v988, %v1240
      %v1265 = vmul.f32 %v989, %v1240
      %v1266 = vmul.f32 %v990, %v1240
      %v1267 = vmul.f32 %v991, %v1240
      %v1268 = vmul.f32 %v992, %v1240
      %v1269 = vmul.f32 %v993, %v1240
      %v1270 = vmul.f32 %v994, %v1240
      %v1271 = vmul.f32 %v995, %v1240
      %v1272 = vmul.f32 %v996, %v1240
      %v1273 = vadd.f32 %v1205, %v1241
      %v1274 = vadd.f32 %v1206, %v1242
      %v1275 = vadd.f32 %v1207, %v1243
      %v1276 = vadd.f32 %v1208, %v1244
      %v1277 = vadd.f32 %v1209, %v1245
      %v1278 = vadd.f32 %v1210, %v1246
      %v1279 = vadd.f32 %v1211, %v1247
      %v1280 = vadd.f32 %v1212, %v1248
      %v1281 = vadd.f32 %v1213, %v1249
      %v1282 = vadd.f32 %v1214, %v1250
      %v1283 = vadd.f32 %v1215, %v1251
      %v1284 = vadd.f32 %v1216, %v1252
      %v1285 = vadd.f32 %v1217, %v1253
      %v1286 = vadd.f32 %v1218, %v1254
      %v1287 = vadd.f32 %v1219, %v1255
      %v1288 = vadd.f32 %v1220, %v1256
      %v1289 = vadd.f32 %v1221, %v1257
      %v1290 = vadd.f32 %v1222, %v1258
      %v1291 = vadd.f32 %v1223, %v1259
      %v1292 = vadd.f32 %v1224, %v1260
      %v1293 = vadd.f32 %v1225, %v1261
      %v1294 = vadd.f32 %v1226, %v1262
      %v1295 = vadd.f32 %v1227, %v1263
      %v1296 = vadd.f32 %v1228, %v1264
      %v1297 = vadd.f32 %v1229, %v1265
      %v1298 = vadd.f32 %v1230, %v1266
      %v1299 = vadd.f32 %v1231, %v1267
      %v1300 = vadd.f32 %v1232, %v1268
      %v1301 = vadd.f32 %v1233, %v1269
      %v1302 = vadd.f32 %v1234, %v1270
      %v1303 = vadd.f32 %v1235, %v1271
      %v1304 = vadd.f32 %v1236, %v1272
      %v1305 = vadd.f32 %v925, %v1273
      %v1306 = vadd.f32 %v926, %v1274
      %v1307 = vadd.f32 %v927, %v1275
      %v1308 = vadd.f32 %v928, %v1276
      %v1309 = vadd.f32 %v929, %v1277
      %v1310 = vadd.f32 %v930, %v1278
      %v1311 = vadd.f32 %v931, %v1279
      %v1312 = vadd.f32 %v932, %v1280
      %v1313 = vadd.f32 %v933, %v1281
      %v1314 = vadd.f32 %v934, %v1282
      %v1315 = vadd.f32 %v935, %v1283
      %v1316 = vadd.f32 %v936, %v1284
      %v1317 = vadd.f32 %v937, %v1285
      %v1318 = vadd.f32 %v938, %v1286
      %v1319 = vadd.f32 %v939, %v1287
      %v1320 = vadd.f32 %v940, %v1288
      %v1321 = vadd.f32 %v941, %v1289
      %v1322 = vadd.f32 %v942, %v1290
      %v1323 = vadd.f32 %v943, %v1291
      %v1324 = vadd.f32 %v944, %v1292
      %v1325 = vadd.f32 %v945, %v1293
      %v1326 = vadd.f32 %v946, %v1294
      %v1327 = vadd.f32 %v947, %v1295
      %v1328 = vadd.f32 %v948, %v1296
      %v1329 = vadd.f32 %v949, %v1297
      %v1330 = vadd.f32 %v950, %v1298
      %v1331 = vadd.f32 %v951, %v1299
      %v1332 = vadd.f32 %v952, %v1300
      %v1333 = vadd.f32 %v953, %v1301
      %v1334 = vadd.f32 %v954, %v1302
      %v1335 = vadd.f32 %v955, %v1303
      %v1336 = vadd.f32 %v956, %v1304
      %v1337 = vld [vmem:[%s179 + $0x3] sm:$0xff]
      %v1338 = vld [vmem:[%s179 + $0xb] sm:$0xff]
      %v1339 = vld [vmem:[%s179 + $0x1b] sm:$0xff]
      %v1340 = vld [vmem:[%s179 + $0x23] sm:$0xff]
      %v1341 = vld [vmem:[%s179 + $0x33] sm:$0xff]
      %v1342 = vld [vmem:[%s179 + $0x3b] sm:$0xff]
      %v1343 = vld [vmem:[%s179 + $0x4b] sm:$0xff]
      %v1344 = vld [vmem:[%s179 + $0x53] sm:$0xff]
      %v1345 = vld [vmem:[%s179 + $0x63] sm:$0xff]
      %v1346 = vld [vmem:[%s179 + $0x6b] sm:$0xff]
      %v1347 = vld [vmem:[%s179 + $0x7b] sm:$0xff]
      %v1348 = vld [vmem:[%s179 + $0x83] sm:$0xff]
      %v1349 = vld [vmem:[%s179 + $0x93] sm:$0xff]
      %v1350 = vld [vmem:[%s179 + $0x9b] sm:$0xff]
      %v1351 = vld [vmem:[%s179 + $0xab] sm:$0xff]
      %v1352 = vld [vmem:[%s179 + $0xb3] sm:$0xff]
      %v1353 = vld [vmem:[%s179 + $0xc3] sm:$0xff]
      %v1354 = vld [vmem:[%s179 + $0xcb] sm:$0xff]
      %v1355 = vld [vmem:[%s179 + $0xdb] sm:$0xff]
      %v1356 = vld [vmem:[%s179 + $0xe3] sm:$0xff]
      %v1357 = vld [vmem:[%s179 + $0xf3] sm:$0xff]
      %v1358 = vld [vmem:[%s179 + $0xfb] sm:$0xff]
      %v1359 = vld [vmem:[%s179 + $0x10b] sm:$0xff]
      %v1360 = vld [vmem:[%s179 + $0x113] sm:$0xff]
      %v1361 = vld [vmem:[%s179 + $0x123] sm:$0xff]
      %v1362 = vld [vmem:[%s179 + $0x12b] sm:$0xff]
      %v1363 = vld [vmem:[%s179 + $0x13b] sm:$0xff]
      %v1364 = vld [vmem:[%s179 + $0x143] sm:$0xff]
      %v1365 = vld [vmem:[%s179 + $0x153] sm:$0xff]
      %v1366 = vld [vmem:[%s179 + $0x15b] sm:$0xff]
      %v1367 = vld [vmem:[%s179 + $0x16b] sm:$0xff]
      %v1368 = vld [vmem:[%s179 + $0x173] sm:$0xff]
      %v1369 = vld [vmem:[%s179 + $0x183] sm:$0xff]
      %v1370 = vld [vmem:[%s179 + $0x18b] sm:$0xff]
      %v1371 = vld [vmem:[%s179 + $0x19b] sm:$0xff]
      %v1372 = vld [vmem:[%s179 + $0x1a3] sm:$0xff]
      %v1373 = vld [vmem:[%s179 + $0x1b3] sm:$0xff]
      %v1374 = vld [vmem:[%s179 + $0x1bb] sm:$0xff]
      %v1375 = vld [vmem:[%s179 + $0x1cb] sm:$0xff]
      %v1376 = vld [vmem:[%s179 + $0x1d3] sm:$0xff]
      %v1377 = vlaneseq
      %v1378 = vshrl.u32 %v1377, 7
      %v1379 = vsub.s32 3, %v1378
      %v1380 = vrot.slane %v192, %v1379
      %v1381 = vmul.f32 %v1337, %v1380
      %v1382 = vmul.f32 %v1338, %v1380
      %v1383 = vmul.f32 %v1339, %v1380
      %v1384 = vmul.f32 %v1340, %v1380
      %v1385 = vmul.f32 %v1341, %v1380
      %v1386 = vmul.f32 %v1342, %v1380
      %v1387 = vmul.f32 %v1343, %v1380
      %v1388 = vmul.f32 %v1344, %v1380
      %v1389 = vmul.f32 %v1345, %v1380
      %v1390 = vmul.f32 %v1346, %v1380
      %v1391 = vmul.f32 %v1347, %v1380
      %v1392 = vmul.f32 %v1348, %v1380
      %v1393 = vmul.f32 %v1349, %v1380
      %v1394 = vmul.f32 %v1350, %v1380
      %v1395 = vmul.f32 %v1351, %v1380
      %v1396 = vmul.f32 %v1352, %v1380
      %v1397 = vmul.f32 %v1353, %v1380
      %v1398 = vmul.f32 %v1354, %v1380
      %v1399 = vmul.f32 %v1355, %v1380
      %v1400 = vmul.f32 %v1356, %v1380
      %v1401 = vmul.f32 %v1357, %v1380
      %v1402 = vmul.f32 %v1358, %v1380
      %v1403 = vmul.f32 %v1359, %v1380
      %v1404 = vmul.f32 %v1360, %v1380
      %v1405 = vmul.f32 %v1361, %v1380
      %v1406 = vmul.f32 %v1362, %v1380
      %v1407 = vmul.f32 %v1363, %v1380
      %v1408 = vmul.f32 %v1364, %v1380
      %v1409 = vmul.f32 %v1365, %v1380
      %v1410 = vmul.f32 %v1366, %v1380
      %v1411 = vmul.f32 %v1367, %v1380
      %v1412 = vmul.f32 %v1368, %v1380
      %v1413 = vlaneseq
      %v1414 = vshrl.u32 %v1413, 7
      %v1415 = vsub.s32 3, %v1414
      %v1416 = vrot.slane %v193, %v1415
      %v1417 = vmul.f32 %v1339, %v1416
      %v1418 = vmul.f32 %v1340, %v1416
      %v1419 = vmul.f32 %v1341, %v1416
      %v1420 = vmul.f32 %v1342, %v1416
      %v1421 = vmul.f32 %v1343, %v1416
      %v1422 = vmul.f32 %v1344, %v1416
      %v1423 = vmul.f32 %v1345, %v1416
      %v1424 = vmul.f32 %v1346, %v1416
      %v1425 = vmul.f32 %v1347, %v1416
      %v1426 = vmul.f32 %v1348, %v1416
      %v1427 = vmul.f32 %v1349, %v1416
      %v1428 = vmul.f32 %v1350, %v1416
      %v1429 = vmul.f32 %v1351, %v1416
      %v1430 = vmul.f32 %v1352, %v1416
      %v1431 = vmul.f32 %v1353, %v1416
      %v1432 = vmul.f32 %v1354, %v1416
      %v1433 = vmul.f32 %v1355, %v1416
      %v1434 = vmul.f32 %v1356, %v1416
      %v1435 = vmul.f32 %v1357, %v1416
      %v1436 = vmul.f32 %v1358, %v1416
      %v1437 = vmul.f32 %v1359, %v1416
      %v1438 = vmul.f32 %v1360, %v1416
      %v1439 = vmul.f32 %v1361, %v1416
      %v1440 = vmul.f32 %v1362, %v1416
      %v1441 = vmul.f32 %v1363, %v1416
      %v1442 = vmul.f32 %v1364, %v1416
      %v1443 = vmul.f32 %v1365, %v1416
      %v1444 = vmul.f32 %v1366, %v1416
      %v1445 = vmul.f32 %v1367, %v1416
      %v1446 = vmul.f32 %v1368, %v1416
      %v1447 = vmul.f32 %v1369, %v1416
      %v1448 = vmul.f32 %v1370, %v1416
      %v1449 = vadd.f32 %v1381, %v1417
      %v1450 = vadd.f32 %v1382, %v1418
      %v1451 = vadd.f32 %v1383, %v1419
      %v1452 = vadd.f32 %v1384, %v1420
      %v1453 = vadd.f32 %v1385, %v1421
      %v1454 = vadd.f32 %v1386, %v1422
      %v1455 = vadd.f32 %v1387, %v1423
      %v1456 = vadd.f32 %v1388, %v1424
      %v1457 = vadd.f32 %v1389, %v1425
      %v1458 = vadd.f32 %v1390, %v1426
      %v1459 = vadd.f32 %v1391, %v1427
      %v1460 = vadd.f32 %v1392, %v1428
      %v1461 = vadd.f32 %v1393, %v1429
      %v1462 = vadd.f32 %v1394, %v1430
      %v1463 = vadd.f32 %v1395, %v1431
      %v1464 = vadd.f32 %v1396, %v1432
      %v1465 = vadd.f32 %v1397, %v1433
      %v1466 = vadd.f32 %v1398, %v1434
      %v1467 = vadd.f32 %v1399, %v1435
      %v1468 = vadd.f32 %v1400, %v1436
      %v1469 = vadd.f32 %v1401, %v1437
      %v1470 = vadd.f32 %v1402, %v1438
      %v1471 = vadd.f32 %v1403, %v1439
      %v1472 = vadd.f32 %v1404, %v1440
      %v1473 = vadd.f32 %v1405, %v1441
      %v1474 = vadd.f32 %v1406, %v1442
      %v1475 = vadd.f32 %v1407, %v1443
      %v1476 = vadd.f32 %v1408, %v1444
      %v1477 = vadd.f32 %v1409, %v1445
      %v1478 = vadd.f32 %v1410, %v1446
      %v1479 = vadd.f32 %v1411, %v1447
      %v1480 = vadd.f32 %v1412, %v1448
      %v1481 = vlaneseq
      %v1482 = vshrl.u32 %v1481, 7
      %v1483 = vsub.s32 3, %v1482
      %v1484 = vrot.slane %v194, %v1483
      %v1485 = vmul.f32 %v1341, %v1484
      %v1486 = vmul.f32 %v1342, %v1484
      %v1487 = vmul.f32 %v1343, %v1484
      %v1488 = vmul.f32 %v1344, %v1484
      %v1489 = vmul.f32 %v1345, %v1484
      %v1490 = vmul.f32 %v1346, %v1484
      %v1491 = vmul.f32 %v1347, %v1484
      %v1492 = vmul.f32 %v1348, %v1484
      %v1493 = vmul.f32 %v1349, %v1484
      %v1494 = vmul.f32 %v1350, %v1484
      %v1495 = vmul.f32 %v1351, %v1484
      %v1496 = vmul.f32 %v1352, %v1484
      %v1497 = vmul.f32 %v1353, %v1484
      %v1498 = vmul.f32 %v1354, %v1484
      %v1499 = vmul.f32 %v1355, %v1484
      %v1500 = vmul.f32 %v1356, %v1484
      %v1501 = vmul.f32 %v1357, %v1484
      %v1502 = vmul.f32 %v1358, %v1484
      %v1503 = vmul.f32 %v1359, %v1484
      %v1504 = vmul.f32 %v1360, %v1484
      %v1505 = vmul.f32 %v1361, %v1484
      %v1506 = vmul.f32 %v1362, %v1484
      %v1507 = vmul.f32 %v1363, %v1484
      %v1508 = vmul.f32 %v1364, %v1484
      %v1509 = vmul.f32 %v1365, %v1484
      %v1510 = vmul.f32 %v1366, %v1484
      %v1511 = vmul.f32 %v1367, %v1484
      %v1512 = vmul.f32 %v1368, %v1484
      %v1513 = vmul.f32 %v1369, %v1484
      %v1514 = vmul.f32 %v1370, %v1484
      %v1515 = vmul.f32 %v1371, %v1484
      %v1516 = vmul.f32 %v1372, %v1484
      %v1517 = vadd.f32 %v1449, %v1485
      %v1518 = vadd.f32 %v1450, %v1486
      %v1519 = vadd.f32 %v1451, %v1487
      %v1520 = vadd.f32 %v1452, %v1488
      %v1521 = vadd.f32 %v1453, %v1489
      %v1522 = vadd.f32 %v1454, %v1490
      %v1523 = vadd.f32 %v1455, %v1491
      %v1524 = vadd.f32 %v1456, %v1492
      %v1525 = vadd.f32 %v1457, %v1493
      %v1526 = vadd.f32 %v1458, %v1494
      %v1527 = vadd.f32 %v1459, %v1495
      %v1528 = vadd.f32 %v1460, %v1496
      %v1529 = vadd.f32 %v1461, %v1497
      %v1530 = vadd.f32 %v1462, %v1498
      %v1531 = vadd.f32 %v1463, %v1499
      %v1532 = vadd.f32 %v1464, %v1500
      %v1533 = vadd.f32 %v1465, %v1501
      %v1534 = vadd.f32 %v1466, %v1502
      %v1535 = vadd.f32 %v1467, %v1503
      %v1536 = vadd.f32 %v1468, %v1504
      %v1537 = vadd.f32 %v1469, %v1505
      %v1538 = vadd.f32 %v1470, %v1506
      %v1539 = vadd.f32 %v1471, %v1507
      %v1540 = vadd.f32 %v1472, %v1508
      %v1541 = vadd.f32 %v1473, %v1509
      %v1542 = vadd.f32 %v1474, %v1510
      %v1543 = vadd.f32 %v1475, %v1511
      %v1544 = vadd.f32 %v1476, %v1512
      %v1545 = vadd.f32 %v1477, %v1513
      %v1546 = vadd.f32 %v1478, %v1514
      %v1547 = vadd.f32 %v1479, %v1515
      %v1548 = vadd.f32 %v1480, %v1516
      %v1549 = vlaneseq
      %v1550 = vshrl.u32 %v1549, 7
      %v1551 = vsub.s32 3, %v1550
      %v1552 = vrot.slane %v195, %v1551
      %v1553 = vmul.f32 %v1343, %v1552
      %v1554 = vmul.f32 %v1344, %v1552
      %v1555 = vmul.f32 %v1345, %v1552
      %v1556 = vmul.f32 %v1346, %v1552
      %v1557 = vmul.f32 %v1347, %v1552
      %v1558 = vmul.f32 %v1348, %v1552
      %v1559 = vmul.f32 %v1349, %v1552
      %v1560 = vmul.f32 %v1350, %v1552
      %v1561 = vmul.f32 %v1351, %v1552
      %v1562 = vmul.f32 %v1352, %v1552
      %v1563 = vmul.f32 %v1353, %v1552
      %v1564 = vmul.f32 %v1354, %v1552
      %v1565 = vmul.f32 %v1355, %v1552
      %v1566 = vmul.f32 %v1356, %v1552
      %v1567 = vmul.f32 %v1357, %v1552
      %v1568 = vmul.f32 %v1358, %v1552
      %v1569 = vmul.f32 %v1359, %v1552
      %v1570 = vmul.f32 %v1360, %v1552
      %v1571 = vmul.f32 %v1361, %v1552
      %v1572 = vmul.f32 %v1362, %v1552
      %v1573 = vmul.f32 %v1363, %v1552
      %v1574 = vmul.f32 %v1364, %v1552
      %v1575 = vmul.f32 %v1365, %v1552
      %v1576 = vmul.f32 %v1366, %v1552
      %v1577 = vmul.f32 %v1367, %v1552
      %v1578 = vmul.f32 %v1368, %v1552
      %v1579 = vmul.f32 %v1369, %v1552
      %v1580 = vmul.f32 %v1370, %v1552
      %v1581 = vmul.f32 %v1371, %v1552
      %v1582 = vmul.f32 %v1372, %v1552
      %v1583 = vmul.f32 %v1373, %v1552
      %v1584 = vmul.f32 %v1374, %v1552
      %v1585 = vadd.f32 %v1517, %v1553
      %v1586 = vadd.f32 %v1518, %v1554
      %v1587 = vadd.f32 %v1519, %v1555
      %v1588 = vadd.f32 %v1520, %v1556
      %v1589 = vadd.f32 %v1521, %v1557
      %v1590 = vadd.f32 %v1522, %v1558
      %v1591 = vadd.f32 %v1523, %v1559
      %v1592 = vadd.f32 %v1524, %v1560
      %v1593 = vadd.f32 %v1525, %v1561
      %v1594 = vadd.f32 %v1526, %v1562
      %v1595 = vadd.f32 %v1527, %v1563
      %v1596 = vadd.f32 %v1528, %v1564
      %v1597 = vadd.f32 %v1529, %v1565
      %v1598 = vadd.f32 %v1530, %v1566
      %v1599 = vadd.f32 %v1531, %v1567
      %v1600 = vadd.f32 %v1532, %v1568
      %v1601 = vadd.f32 %v1533, %v1569
      %v1602 = vadd.f32 %v1534, %v1570
      %v1603 = vadd.f32 %v1535, %v1571
      %v1604 = vadd.f32 %v1536, %v1572
      %v1605 = vadd.f32 %v1537, %v1573
      %v1606 = vadd.f32 %v1538, %v1574
      %v1607 = vadd.f32 %v1539, %v1575
      %v1608 = vadd.f32 %v1540, %v1576
      %v1609 = vadd.f32 %v1541, %v1577
      %v1610 = vadd.f32 %v1542, %v1578
      %v1611 = vadd.f32 %v1543, %v1579
      %v1612 = vadd.f32 %v1544, %v1580
      %v1613 = vadd.f32 %v1545, %v1581
      %v1614 = vadd.f32 %v1546, %v1582
      %v1615 = vadd.f32 %v1547, %v1583
      %v1616 = vadd.f32 %v1548, %v1584
      %v1617 = vlaneseq
      %v1618 = vshrl.u32 %v1617, 7
      %v1619 = vsub.s32 3, %v1618
      %v1620 = vrot.slane %v196, %v1619
      %v1621 = vmul.f32 %v1345, %v1620
      %v1622 = vmul.f32 %v1346, %v1620
      %v1623 = vmul.f32 %v1347, %v1620
      %v1624 = vmul.f32 %v1348, %v1620
      %v1625 = vmul.f32 %v1349, %v1620
      %v1626 = vmul.f32 %v1350, %v1620
      %v1627 = vmul.f32 %v1351, %v1620
      %v1628 = vmul.f32 %v1352, %v1620
      %v1629 = vmul.f32 %v1353, %v1620
      %v1630 = vmul.f32 %v1354, %v1620
      %v1631 = vmul.f32 %v1355, %v1620
      %v1632 = vmul.f32 %v1356, %v1620
      %v1633 = vmul.f32 %v1357, %v1620
      %v1634 = vmul.f32 %v1358, %v1620
      %v1635 = vmul.f32 %v1359, %v1620
      %v1636 = vmul.f32 %v1360, %v1620
      %v1637 = vmul.f32 %v1361, %v1620
      %v1638 = vmul.f32 %v1362, %v1620
      %v1639 = vmul.f32 %v1363, %v1620
      %v1640 = vmul.f32 %v1364, %v1620
      %v1641 = vmul.f32 %v1365, %v1620
      %v1642 = vmul.f32 %v1366, %v1620
      %v1643 = vmul.f32 %v1367, %v1620
      %v1644 = vmul.f32 %v1368, %v1620
      %v1645 = vmul.f32 %v1369, %v1620
      %v1646 = vmul.f32 %v1370, %v1620
      %v1647 = vmul.f32 %v1371, %v1620
      %v1648 = vmul.f32 %v1372, %v1620
      %v1649 = vmul.f32 %v1373, %v1620
      %v1650 = vmul.f32 %v1374, %v1620
      %v1651 = vmul.f32 %v1375, %v1620
      %v1652 = vmul.f32 %v1376, %v1620
      %v1653 = vadd.f32 %v1585, %v1621
      %v1654 = vadd.f32 %v1586, %v1622
      %v1655 = vadd.f32 %v1587, %v1623
      %v1656 = vadd.f32 %v1588, %v1624
      %v1657 = vadd.f32 %v1589, %v1625
      %v1658 = vadd.f32 %v1590, %v1626
      %v1659 = vadd.f32 %v1591, %v1627
      %v1660 = vadd.f32 %v1592, %v1628
      %v1661 = vadd.f32 %v1593, %v1629
      %v1662 = vadd.f32 %v1594, %v1630
      %v1663 = vadd.f32 %v1595, %v1631
      %v1664 = vadd.f32 %v1596, %v1632
      %v1665 = vadd.f32 %v1597, %v1633
      %v1666 = vadd.f32 %v1598, %v1634
      %v1667 = vadd.f32 %v1599, %v1635
      %v1668 = vadd.f32 %v1600, %v1636
      %v1669 = vadd.f32 %v1601, %v1637
      %v1670 = vadd.f32 %v1602, %v1638
      %v1671 = vadd.f32 %v1603, %v1639
      %v1672 = vadd.f32 %v1604, %v1640
      %v1673 = vadd.f32 %v1605, %v1641
      %v1674 = vadd.f32 %v1606, %v1642
      %v1675 = vadd.f32 %v1607, %v1643
      %v1676 = vadd.f32 %v1608, %v1644
      %v1677 = vadd.f32 %v1609, %v1645
      %v1678 = vadd.f32 %v1610, %v1646
      %v1679 = vadd.f32 %v1611, %v1647
      %v1680 = vadd.f32 %v1612, %v1648
      %v1681 = vadd.f32 %v1613, %v1649
      %v1682 = vadd.f32 %v1614, %v1650
      %v1683 = vadd.f32 %v1615, %v1651
      %v1684 = vadd.f32 %v1616, %v1652
      %v1685 = vadd.f32 %v1305, %v1653
      %v1686 = vadd.f32 %v1306, %v1654
      %v1687 = vadd.f32 %v1307, %v1655
      %v1688 = vadd.f32 %v1308, %v1656
      %v1689 = vadd.f32 %v1309, %v1657
      %v1690 = vadd.f32 %v1310, %v1658
      %v1691 = vadd.f32 %v1311, %v1659
      %v1692 = vadd.f32 %v1312, %v1660
      %v1693 = vadd.f32 %v1313, %v1661
      %v1694 = vadd.f32 %v1314, %v1662
      %v1695 = vadd.f32 %v1315, %v1663
      %v1696 = vadd.f32 %v1316, %v1664
      %v1697 = vadd.f32 %v1317, %v1665
      %v1698 = vadd.f32 %v1318, %v1666
      %v1699 = vadd.f32 %v1319, %v1667
      %v1700 = vadd.f32 %v1320, %v1668
      %v1701 = vadd.f32 %v1321, %v1669
      %v1702 = vadd.f32 %v1322, %v1670
      %v1703 = vadd.f32 %v1323, %v1671
      %v1704 = vadd.f32 %v1324, %v1672
      %v1705 = vadd.f32 %v1325, %v1673
      %v1706 = vadd.f32 %v1326, %v1674
      %v1707 = vadd.f32 %v1327, %v1675
      %v1708 = vadd.f32 %v1328, %v1676
      %v1709 = vadd.f32 %v1329, %v1677
      %v1710 = vadd.f32 %v1330, %v1678
      %v1711 = vadd.f32 %v1331, %v1679
      %v1712 = vadd.f32 %v1332, %v1680
      %v1713 = vadd.f32 %v1333, %v1681
      %v1714 = vadd.f32 %v1334, %v1682
      %v1715 = vadd.f32 %v1335, %v1683
      %v1716 = vadd.f32 %v1336, %v1684
      %v1717 = vld [vmem:[%s179 + $0x4] sm:$0xff]
      %v1718 = vld [vmem:[%s179 + $0xc] sm:$0xff]
      %v1719 = vld [vmem:[%s179 + $0x1c] sm:$0xff]
      %v1720 = vld [vmem:[%s179 + $0x24] sm:$0xff]
      %v1721 = vld [vmem:[%s179 + $0x34] sm:$0xff]
      %v1722 = vld [vmem:[%s179 + $0x3c] sm:$0xff]
      %v1723 = vld [vmem:[%s179 + $0x4c] sm:$0xff]
      %v1724 = vld [vmem:[%s179 + $0x54] sm:$0xff]
      %v1725 = vld [vmem:[%s179 + $0x64] sm:$0xff]
      %v1726 = vld [vmem:[%s179 + $0x6c] sm:$0xff]
      %v1727 = vld [vmem:[%s179 + $0x7c] sm:$0xff]
      %v1728 = vld [vmem:[%s179 + $0x84] sm:$0xff]
      %v1729 = vld [vmem:[%s179 + $0x94] sm:$0xff]
      %v1730 = vld [vmem:[%s179 + $0x9c] sm:$0xff]
      %v1731 = vld [vmem:[%s179 + $0xac] sm:$0xff]
      %v1732 = vld [vmem:[%s179 + $0xb4] sm:$0xff]
      %v1733 = vld [vmem:[%s179 + $0xc4] sm:$0xff]
      %v1734 = vld [vmem:[%s179 + $0xcc] sm:$0xff]
      %v1735 = vld [vmem:[%s179 + $0xdc] sm:$0xff]
      %v1736 = vld [vmem:[%s179 + $0xe4] sm:$0xff]
      %v1737 = vld [vmem:[%s179 + $0xf4] sm:$0xff]
      %v1738 = vld [vmem:[%s179 + $0xfc] sm:$0xff]
      %v1739 = vld [vmem:[%s179 + $0x10c] sm:$0xff]
      %v1740 = vld [vmem:[%s179 + $0x114] sm:$0xff]
      %v1741 = vld [vmem:[%s179 + $0x124] sm:$0xff]
      %v1742 = vld [vmem:[%s179 + $0x12c] sm:$0xff]
      %v1743 = vld [vmem:[%s179 + $0x13c] sm:$0xff]
      %v1744 = vld [vmem:[%s179 + $0x144] sm:$0xff]
      %v1745 = vld [vmem:[%s179 + $0x154] sm:$0xff]
      %v1746 = vld [vmem:[%s179 + $0x15c] sm:$0xff]
      %v1747 = vld [vmem:[%s179 + $0x16c] sm:$0xff]
      %v1748 = vld [vmem:[%s179 + $0x174] sm:$0xff]
      %v1749 = vld [vmem:[%s179 + $0x184] sm:$0xff]
      %v1750 = vld [vmem:[%s179 + $0x18c] sm:$0xff]
      %v1751 = vld [vmem:[%s179 + $0x19c] sm:$0xff]
      %v1752 = vld [vmem:[%s179 + $0x1a4] sm:$0xff]
      %v1753 = vld [vmem:[%s179 + $0x1b4] sm:$0xff]
      %v1754 = vld [vmem:[%s179 + $0x1bc] sm:$0xff]
      %v1755 = vld [vmem:[%s179 + $0x1cc] sm:$0xff]
      %v1756 = vld [vmem:[%s179 + $0x1d4] sm:$0xff]
      %v1757 = vlaneseq
      %v1758 = vshrl.u32 %v1757, 7
      %v1759 = vsub.s32 4, %v1758
      %v1760 = vrot.slane %v192, %v1759
      %v1761 = vmul.f32 %v1717, %v1760
      %v1762 = vmul.f32 %v1718, %v1760
      %v1763 = vmul.f32 %v1719, %v1760
      %v1764 = vmul.f32 %v1720, %v1760
      %v1765 = vmul.f32 %v1721, %v1760
      %v1766 = vmul.f32 %v1722, %v1760
      %v1767 = vmul.f32 %v1723, %v1760
      %v1768 = vmul.f32 %v1724, %v1760
      %v1769 = vmul.f32 %v1725, %v1760
      %v1770 = vmul.f32 %v1726, %v1760
      %v1771 = vmul.f32 %v1727, %v1760
      %v1772 = vmul.f32 %v1728, %v1760
      %v1773 = vmul.f32 %v1729, %v1760
      %v1774 = vmul.f32 %v1730, %v1760
      %v1775 = vmul.f32 %v1731, %v1760
      %v1776 = vmul.f32 %v1732, %v1760
      %v1777 = vmul.f32 %v1733, %v1760
      %v1778 = vmul.f32 %v1734, %v1760
      %v1779 = vmul.f32 %v1735, %v1760
      %v1780 = vmul.f32 %v1736, %v1760
      %v1781 = vmul.f32 %v1737, %v1760
      %v1782 = vmul.f32 %v1738, %v1760
      %v1783 = vmul.f32 %v1739, %v1760
      %v1784 = vmul.f32 %v1740, %v1760
      %v1785 = vmul.f32 %v1741, %v1760
      %v1786 = vmul.f32 %v1742, %v1760
      %v1787 = vmul.f32 %v1743, %v1760
      %v1788 = vmul.f32 %v1744, %v1760
      %v1789 = vmul.f32 %v1745, %v1760
      %v1790 = vmul.f32 %v1746, %v1760
      %v1791 = vmul.f32 %v1747, %v1760
      %v1792 = vmul.f32 %v1748, %v1760
      %v1793 = vlaneseq
      %v1794 = vshrl.u32 %v1793, 7
      %v1795 = vsub.s32 4, %v1794
      %v1796 = vrot.slane %v193, %v1795
      %v1797 = vmul.f32 %v1719, %v1796
      %v1798 = vmul.f32 %v1720, %v1796
      %v1799 = vmul.f32 %v1721, %v1796
      %v1800 = vmul.f32 %v1722, %v1796
      %v1801 = vmul.f32 %v1723, %v1796
      %v1802 = vmul.f32 %v1724, %v1796
      %v1803 = vmul.f32 %v1725, %v1796
      %v1804 = vmul.f32 %v1726, %v1796
      %v1805 = vmul.f32 %v1727, %v1796
      %v1806 = vmul.f32 %v1728, %v1796
      %v1807 = vmul.f32 %v1729, %v1796
      %v1808 = vmul.f32 %v1730, %v1796
      %v1809 = vmul.f32 %v1731, %v1796
      %v1810 = vmul.f32 %v1732, %v1796
      %v1811 = vmul.f32 %v1733, %v1796
      %v1812 = vmul.f32 %v1734, %v1796
      %v1813 = vmul.f32 %v1735, %v1796
      %v1814 = vmul.f32 %v1736, %v1796
      %v1815 = vmul.f32 %v1737, %v1796
      %v1816 = vmul.f32 %v1738, %v1796
      %v1817 = vmul.f32 %v1739, %v1796
      %v1818 = vmul.f32 %v1740, %v1796
      %v1819 = vmul.f32 %v1741, %v1796
      %v1820 = vmul.f32 %v1742, %v1796
      %v1821 = vmul.f32 %v1743, %v1796
      %v1822 = vmul.f32 %v1744, %v1796
      %v1823 = vmul.f32 %v1745, %v1796
      %v1824 = vmul.f32 %v1746, %v1796
      %v1825 = vmul.f32 %v1747, %v1796
      %v1826 = vmul.f32 %v1748, %v1796
      %v1827 = vmul.f32 %v1749, %v1796
      %v1828 = vmul.f32 %v1750, %v1796
      %v1829 = vadd.f32 %v1761, %v1797
      %v1830 = vadd.f32 %v1762, %v1798
      %v1831 = vadd.f32 %v1763, %v1799
      %v1832 = vadd.f32 %v1764, %v1800
      %v1833 = vadd.f32 %v1765, %v1801
      %v1834 = vadd.f32 %v1766, %v1802
      %v1835 = vadd.f32 %v1767, %v1803
      %v1836 = vadd.f32 %v1768, %v1804
      %v1837 = vadd.f32 %v1769, %v1805
      %v1838 = vadd.f32 %v1770, %v1806
      %v1839 = vadd.f32 %v1771, %v1807
      %v1840 = vadd.f32 %v1772, %v1808
      %v1841 = vadd.f32 %v1773, %v1809
      %v1842 = vadd.f32 %v1774, %v1810
      %v1843 = vadd.f32 %v1775, %v1811
      %v1844 = vadd.f32 %v1776, %v1812
      %v1845 = vadd.f32 %v1777, %v1813
      %v1846 = vadd.f32 %v1778, %v1814
      %v1847 = vadd.f32 %v1779, %v1815
      %v1848 = vadd.f32 %v1780, %v1816
      %v1849 = vadd.f32 %v1781, %v1817
      %v1850 = vadd.f32 %v1782, %v1818
      %v1851 = vadd.f32 %v1783, %v1819
      %v1852 = vadd.f32 %v1784, %v1820
      %v1853 = vadd.f32 %v1785, %v1821
      %v1854 = vadd.f32 %v1786, %v1822
      %v1855 = vadd.f32 %v1787, %v1823
      %v1856 = vadd.f32 %v1788, %v1824
      %v1857 = vadd.f32 %v1789, %v1825
      %v1858 = vadd.f32 %v1790, %v1826
      %v1859 = vadd.f32 %v1791, %v1827
      %v1860 = vadd.f32 %v1792, %v1828
      %v1861 = vlaneseq
      %v1862 = vshrl.u32 %v1861, 7
      %v1863 = vsub.s32 4, %v1862
      %v1864 = vrot.slane %v194, %v1863
      %v1865 = vmul.f32 %v1721, %v1864
      %v1866 = vmul.f32 %v1722, %v1864
      %v1867 = vmul.f32 %v1723, %v1864
      %v1868 = vmul.f32 %v1724, %v1864
      %v1869 = vmul.f32 %v1725, %v1864
      %v1870 = vmul.f32 %v1726, %v1864
      %v1871 = vmul.f32 %v1727, %v1864
      %v1872 = vmul.f32 %v1728, %v1864
      %v1873 = vmul.f32 %v1729, %v1864
      %v1874 = vmul.f32 %v1730, %v1864
      %v1875 = vmul.f32 %v1731, %v1864
      %v1876 = vmul.f32 %v1732, %v1864
      %v1877 = vmul.f32 %v1733, %v1864
      %v1878 = vmul.f32 %v1734, %v1864
      %v1879 = vmul.f32 %v1735, %v1864
      %v1880 = vmul.f32 %v1736, %v1864
      %v1881 = vmul.f32 %v1737, %v1864
      %v1882 = vmul.f32 %v1738, %v1864
      %v1883 = vmul.f32 %v1739, %v1864
      %v1884 = vmul.f32 %v1740, %v1864
      %v1885 = vmul.f32 %v1741, %v1864
      %v1886 = vmul.f32 %v1742, %v1864
      %v1887 = vmul.f32 %v1743, %v1864
      %v1888 = vmul.f32 %v1744, %v1864
      %v1889 = vmul.f32 %v1745, %v1864
      %v1890 = vmul.f32 %v1746, %v1864
      %v1891 = vmul.f32 %v1747, %v1864
      %v1892 = vmul.f32 %v1748, %v1864
      %v1893 = vmul.f32 %v1749, %v1864
      %v1894 = vmul.f32 %v1750, %v1864
      %v1895 = vmul.f32 %v1751, %v1864
      %v1896 = vmul.f32 %v1752, %v1864
      %v1897 = vadd.f32 %v1829, %v1865
      %v1898 = vadd.f32 %v1830, %v1866
      %v1899 = vadd.f32 %v1831, %v1867
      %v1900 = vadd.f32 %v1832, %v1868
      %v1901 = vadd.f32 %v1833, %v1869
      %v1902 = vadd.f32 %v1834, %v1870
      %v1903 = vadd.f32 %v1835, %v1871
      %v1904 = vadd.f32 %v1836, %v1872
      %v1905 = vadd.f32 %v1837, %v1873
      %v1906 = vadd.f32 %v1838, %v1874
      %v1907 = vadd.f32 %v1839, %v1875
      %v1908 = vadd.f32 %v1840, %v1876
      %v1909 = vadd.f32 %v1841, %v1877
      %v1910 = vadd.f32 %v1842, %v1878
      %v1911 = vadd.f32 %v1843, %v1879
      %v1912 = vadd.f32 %v1844, %v1880
      %v1913 = vadd.f32 %v1845, %v1881
      %v1914 = vadd.f32 %v1846, %v1882
      %v1915 = vadd.f32 %v1847, %v1883
      %v1916 = vadd.f32 %v1848, %v1884
      %v1917 = vadd.f32 %v1849, %v1885
      %v1918 = vadd.f32 %v1850, %v1886
      %v1919 = vadd.f32 %v1851, %v1887
      %v1920 = vadd.f32 %v1852, %v1888
      %v1921 = vadd.f32 %v1853, %v1889
      %v1922 = vadd.f32 %v1854, %v1890
      %v1923 = vadd.f32 %v1855, %v1891
      %v1924 = vadd.f32 %v1856, %v1892
      %v1925 = vadd.f32 %v1857, %v1893
      %v1926 = vadd.f32 %v1858, %v1894
      %v1927 = vadd.f32 %v1859, %v1895
      %v1928 = vadd.f32 %v1860, %v1896
      %v1929 = vlaneseq
      %v1930 = vshrl.u32 %v1929, 7
      %v1931 = vsub.s32 4, %v1930
      %v1932 = vrot.slane %v195, %v1931
      %v1933 = vmul.f32 %v1723, %v1932
      %v1934 = vmul.f32 %v1724, %v1932
      %v1935 = vmul.f32 %v1725, %v1932
      %v1936 = vmul.f32 %v1726, %v1932
      %v1937 = vmul.f32 %v1727, %v1932
      %v1938 = vmul.f32 %v1728, %v1932
      %v1939 = vmul.f32 %v1729, %v1932
      %v1940 = vmul.f32 %v1730, %v1932
      %v1941 = vmul.f32 %v1731, %v1932
      %v1942 = vmul.f32 %v1732, %v1932
      %v1943 = vmul.f32 %v1733, %v1932
      %v1944 = vmul.f32 %v1734, %v1932
      %v1945 = vmul.f32 %v1735, %v1932
      %v1946 = vmul.f32 %v1736, %v1932
      %v1947 = vmul.f32 %v1737, %v1932
      %v1948 = vmul.f32 %v1738, %v1932
      %v1949 = vmul.f32 %v1739, %v1932
      %v1950 = vmul.f32 %v1740, %v1932
      %v1951 = vmul.f32 %v1741, %v1932
      %v1952 = vmul.f32 %v1742, %v1932
      %v1953 = vmul.f32 %v1743, %v1932
      %v1954 = vmul.f32 %v1744, %v1932
      %v1955 = vmul.f32 %v1745, %v1932
      %v1956 = vmul.f32 %v1746, %v1932
      %v1957 = vmul.f32 %v1747, %v1932
      %v1958 = vmul.f32 %v1748, %v1932
      %v1959 = vmul.f32 %v1749, %v1932
      %v1960 = vmul.f32 %v1750, %v1932
      %v1961 = vmul.f32 %v1751, %v1932
      %v1962 = vmul.f32 %v1752, %v1932
      %v1963 = vmul.f32 %v1753, %v1932
      %v1964 = vmul.f32 %v1754, %v1932
      %v1965 = vadd.f32 %v1897, %v1933
      %v1966 = vadd.f32 %v1898, %v1934
      %v1967 = vadd.f32 %v1899, %v1935
      %v1968 = vadd.f32 %v1900, %v1936
      %v1969 = vadd.f32 %v1901, %v1937
      %v1970 = vadd.f32 %v1902, %v1938
      %v1971 = vadd.f32 %v1903, %v1939
      %v1972 = vadd.f32 %v1904, %v1940
      %v1973 = vadd.f32 %v1905, %v1941
      %v1974 = vadd.f32 %v1906, %v1942
      %v1975 = vadd.f32 %v1907, %v1943
      %v1976 = vadd.f32 %v1908, %v1944
      %v1977 = vadd.f32 %v1909, %v1945
      %v1978 = vadd.f32 %v1910, %v1946
      %v1979 = vadd.f32 %v1911, %v1947
      %v1980 = vadd.f32 %v1912, %v1948
      %v1981 = vadd.f32 %v1913, %v1949
      %v1982 = vadd.f32 %v1914, %v1950
      %v1983 = vadd.f32 %v1915, %v1951
      %v1984 = vadd.f32 %v1916, %v1952
      %v1985 = vadd.f32 %v1917, %v1953
      %v1986 = vadd.f32 %v1918, %v1954
      %v1987 = vadd.f32 %v1919, %v1955
      %v1988 = vadd.f32 %v1920, %v1956
      %v1989 = vadd.f32 %v1921, %v1957
      %v1990 = vadd.f32 %v1922, %v1958
      %v1991 = vadd.f32 %v1923, %v1959
      %v1992 = vadd.f32 %v1924, %v1960
      %v1993 = vadd.f32 %v1925, %v1961
      %v1994 = vadd.f32 %v1926, %v1962
      %v1995 = vadd.f32 %v1927, %v1963
      %v1996 = vadd.f32 %v1928, %v1964
      %v1997 = vlaneseq
      %v1998 = vshrl.u32 %v1997, 7
      %v1999 = vsub.s32 4, %v1998
      %v2000 = vrot.slane %v196, %v1999
      %v2001 = vmul.f32 %v1725, %v2000
      %v2002 = vmul.f32 %v1726, %v2000
      %v2003 = vmul.f32 %v1727, %v2000
      %v2004 = vmul.f32 %v1728, %v2000
      %v2005 = vmul.f32 %v1729, %v2000
      %v2006 = vmul.f32 %v1730, %v2000
      %v2007 = vmul.f32 %v1731, %v2000
      %v2008 = vmul.f32 %v1732, %v2000
      %v2009 = vmul.f32 %v1733, %v2000
      %v2010 = vmul.f32 %v1734, %v2000
      %v2011 = vmul.f32 %v1735, %v2000
      %v2012 = vmul.f32 %v1736, %v2000
      %v2013 = vmul.f32 %v1737, %v2000
      %v2014 = vmul.f32 %v1738, %v2000
      %v2015 = vmul.f32 %v1739, %v2000
      %v2016 = vmul.f32 %v1740, %v2000
      %v2017 = vmul.f32 %v1741, %v2000
      %v2018 = vmul.f32 %v1742, %v2000
      %v2019 = vmul.f32 %v1743, %v2000
      %v2020 = vmul.f32 %v1744, %v2000
      %v2021 = vmul.f32 %v1745, %v2000
      %v2022 = vmul.f32 %v1746, %v2000
      %v2023 = vmul.f32 %v1747, %v2000
      %v2024 = vmul.f32 %v1748, %v2000
      %v2025 = vmul.f32 %v1749, %v2000
      %v2026 = vmul.f32 %v1750, %v2000
      %v2027 = vmul.f32 %v1751, %v2000
      %v2028 = vmul.f32 %v1752, %v2000
      %v2029 = vmul.f32 %v1753, %v2000
      %v2030 = vmul.f32 %v1754, %v2000
      %v2031 = vmul.f32 %v1755, %v2000
      %v2032 = vmul.f32 %v1756, %v2000
      %v2033 = vadd.f32 %v1965, %v2001
      %v2034 = vadd.f32 %v1966, %v2002
      %v2035 = vadd.f32 %v1967, %v2003
      %v2036 = vadd.f32 %v1968, %v2004
      %v2037 = vadd.f32 %v1969, %v2005
      %v2038 = vadd.f32 %v1970, %v2006
      %v2039 = vadd.f32 %v1971, %v2007
      %v2040 = vadd.f32 %v1972, %v2008
      %v2041 = vadd.f32 %v1973, %v2009
      %v2042 = vadd.f32 %v1974, %v2010
      %v2043 = vadd.f32 %v1975, %v2011
      %v2044 = vadd.f32 %v1976, %v2012
      %v2045 = vadd.f32 %v1977, %v2013
      %v2046 = vadd.f32 %v1978, %v2014
      %v2047 = vadd.f32 %v1979, %v2015
      %v2048 = vadd.f32 %v1980, %v2016
      %v2049 = vadd.f32 %v1981, %v2017
      %v2050 = vadd.f32 %v1982, %v2018
      %v2051 = vadd.f32 %v1983, %v2019
      %v2052 = vadd.f32 %v1984, %v2020
      %v2053 = vadd.f32 %v1985, %v2021
      %v2054 = vadd.f32 %v1986, %v2022
      %v2055 = vadd.f32 %v1987, %v2023
      %v2056 = vadd.f32 %v1988, %v2024
      %v2057 = vadd.f32 %v1989, %v2025
      %v2058 = vadd.f32 %v1990, %v2026
      %v2059 = vadd.f32 %v1991, %v2027
      %v2060 = vadd.f32 %v1992, %v2028
      %v2061 = vadd.f32 %v1993, %v2029
      %v2062 = vadd.f32 %v1994, %v2030
      %v2063 = vadd.f32 %v1995, %v2031
      %v2064 = vadd.f32 %v1996, %v2032
      %v2065 = vadd.f32 %v1685, %v2033
      %v2066 = vadd.f32 %v1686, %v2034
      %v2067 = vadd.f32 %v1687, %v2035
      %v2068 = vadd.f32 %v1688, %v2036
      %v2069 = vadd.f32 %v1689, %v2037
      %v2070 = vadd.f32 %v1690, %v2038
      %v2071 = vadd.f32 %v1691, %v2039
      %v2072 = vadd.f32 %v1692, %v2040
      %v2073 = vadd.f32 %v1693, %v2041
      %v2074 = vadd.f32 %v1694, %v2042
      %v2075 = vadd.f32 %v1695, %v2043
      %v2076 = vadd.f32 %v1696, %v2044
      %v2077 = vadd.f32 %v1697, %v2045
      %v2078 = vadd.f32 %v1698, %v2046
      %v2079 = vadd.f32 %v1699, %v2047
      %v2080 = vadd.f32 %v1700, %v2048
      %v2081 = vadd.f32 %v1701, %v2049
      %v2082 = vadd.f32 %v1702, %v2050
      %v2083 = vadd.f32 %v1703, %v2051
      %v2084 = vadd.f32 %v1704, %v2052
      %v2085 = vadd.f32 %v1705, %v2053
      %v2086 = vadd.f32 %v1706, %v2054
      %v2087 = vadd.f32 %v1707, %v2055
      %v2088 = vadd.f32 %v1708, %v2056
      %v2089 = vadd.f32 %v1709, %v2057
      %v2090 = vadd.f32 %v1710, %v2058
      %v2091 = vadd.f32 %v1711, %v2059
      %v2092 = vadd.f32 %v1712, %v2060
      %v2093 = vadd.f32 %v1713, %v2061
      %v2094 = vadd.f32 %v1714, %v2062
      %v2095 = vadd.f32 %v1715, %v2063
      %v2096 = vadd.f32 %v1716, %v2064
      %vm2097 = vcmask 64512
      %2098 = vst.msk [vmem:[%s191] sm:$0xff] %vm2097, %v2065
      %2099 = vst.msk [vmem:[%s191 + $0x8] sm:$0xff] %vm2097, %v2066
      %2100 = vst.msk [vmem:[%s191 + $0x10] sm:$0xff] %vm2097, %v2067
      %2101 = vst.msk [vmem:[%s191 + $0x18] sm:$0xff] %vm2097, %v2068
      %2102 = vst.msk [vmem:[%s191 + $0x20] sm:$0xff] %vm2097, %v2069
      %2103 = vst.msk [vmem:[%s191 + $0x28] sm:$0xff] %vm2097, %v2070
      %2104 = vst.msk [vmem:[%s191 + $0x30] sm:$0xff] %vm2097, %v2071
      %2105 = vst.msk [vmem:[%s191 + $0x38] sm:$0xff] %vm2097, %v2072
      %2106 = vst.msk [vmem:[%s191 + $0x40] sm:$0xff] %vm2097, %v2073
      %2107 = vst.msk [vmem:[%s191 + $0x48] sm:$0xff] %vm2097, %v2074
      %2108 = vst.msk [vmem:[%s191 + $0x50] sm:$0xff] %vm2097, %v2075
      %2109 = vst.msk [vmem:[%s191 + $0x58] sm:$0xff] %vm2097, %v2076
      %2110 = vst.msk [vmem:[%s191 + $0x60] sm:$0xff] %vm2097, %v2077
      %2111 = vst.msk [vmem:[%s191 + $0x68] sm:$0xff] %vm2097, %v2078
      %2112 = vst.msk [vmem:[%s191 + $0x70] sm:$0xff] %vm2097, %v2079
      %2113 = vst.msk [vmem:[%s191 + $0x78] sm:$0xff] %vm2097, %v2080
      %2114 = vst.msk [vmem:[%s191 + $0x80] sm:$0xff] %vm2097, %v2081
      %2115 = vst.msk [vmem:[%s191 + $0x88] sm:$0xff] %vm2097, %v2082
      %2116 = vst.msk [vmem:[%s191 + $0x90] sm:$0xff] %vm2097, %v2083
      %2117 = vst.msk [vmem:[%s191 + $0x98] sm:$0xff] %vm2097, %v2084
      %2118 = vst.msk [vmem:[%s191 + $0xa0] sm:$0xff] %vm2097, %v2085
      %2119 = vst.msk [vmem:[%s191 + $0xa8] sm:$0xff] %vm2097, %v2086
      %2120 = vst.msk [vmem:[%s191 + $0xb0] sm:$0xff] %vm2097, %v2087
      %2121 = vst.msk [vmem:[%s191 + $0xb8] sm:$0xff] %vm2097, %v2088
      %2122 = vst.msk [vmem:[%s191 + $0xc0] sm:$0xff] %vm2097, %v2089
      %2123 = vst.msk [vmem:[%s191 + $0xc8] sm:$0xff] %vm2097, %v2090
      %2124 = vst.msk [vmem:[%s191 + $0xd0] sm:$0xff] %vm2097, %v2091
      %2125 = vst.msk [vmem:[%s191 + $0xd8] sm:$0xff] %vm2097, %v2092
      %2126 = vst.msk [vmem:[%s191 + $0xe0] sm:$0xff] %vm2097, %v2093
      %2127 = vst.msk [vmem:[%s191 + $0xe8] sm:$0xff] %vm2097, %v2094
      %2128 = vst.msk [vmem:[%s191 + $0xf0] sm:$0xff] %vm2097, %v2095
      %2129 = vst.msk [vmem:[%s191 + $0xf8] sm:$0xff] %vm2097, %v2096
      %p2130 = scmp.lt.s32.totalorder %s18, 1
      %s2131 = scalar_select %p2130, %s18, 1
      %p2132 = scmp.lt.s32.totalorder %s17, 0
      %s2133 = scalar_select %p2132, %s17, 0
      %s2134 = smul.addr %s2131, 32
      %s2135 = sadd.s32 %s2133, %s2134
      %s2136 = smul.addr %s2135, 8
      %s2137 = scalar_lea.vmem %s2, %s2136
      // Predicated region
      $region29: #{tpu_custom_call.1} parent=27 // pred_check
        %p2138 = pneg %p99
      $region30: #{tpu_custom_call.1} parent=27 // pred_check_branch
        %2140 = sbr.rel (%p2138) target = $region32
      $region31: #{tpu_custom_call.1} parent=27 // pred_region
        _
      $region32: #{tpu_custom_call.1} parent=27 // pred_fallthru
        _
    $region28: #{tpu_custom_call.1} parent=5 // pred_fallthru
      _
    %p2141 = scmp.le.s32.totalorder 2, %s8
    // Predicated region
    $region33: #{tpu_custom_call.1} parent=5 // pred_check
      %p2142 = pneg %p2141
    $region34: #{tpu_custom_call.1} parent=5 // pred_check_branch
      %2144 = sbr.rel (%p2142) target = $region36
    $region35: #{tpu_custom_call.1} parent=5 // pred_region
      %s2145 = ssub.s32 %s8, 2
      // Predicated region
      $region37: #{tpu_custom_call.1} parent=35 // pred_check
        %p2146 = pneg %p105
      $region38: #{tpu_custom_call.1} parent=35 // pred_check_branch
        %2148 = sbr.rel (%p2146) target = $region40
      $region39: #{tpu_custom_call.1} parent=35 // pred_region
        %p2149 = scmp.lt.s32.totalorder %s20, 1
        %s2150 = scalar_select %p2149, %s20, 1
        %p2151 = scmp.lt.s32.totalorder %s19, 0
        %s2152 = scalar_select %p2151, %s19, 0
        %s2153 = smul.addr %s2150, 32
        %s2154 = sadd.s32 %s2152, %s2153
        %s2155 = smul.addr %s2154, 8
        %s2156 = scalar_lea.vmem %s2, %s2155
      $region40: #{tpu_custom_call.1} parent=35 // pred_fallthru
        _
    $region36: #{tpu_custom_call.1} parent=5 // pred_fallthru
      _
  $region6: #{tpu_custom_call.1} parent=0 // loop_footer
    %s12 = sadd.s32 1, %s8
  $region7: #{tpu_custom_call.1} parent=0 // loop_footer_branch
    %7 = sbr.rel target = $region3
  $region8: #{tpu_custom_call.1} parent=0 // loop_exit
    _

</llo_original>
